<compile_context>
chip_gen: v7x
topology: tpu7x:2x2x1
jax: 0.10.0
libtpu: 0.0.40
codegen_flags: <defaults>
</compile_context>

<pallas_src>
import math

import jax
import jax.numpy as jnp
from jax.experimental import pallas as pl
from jax.experimental.pallas import tpu as pltpu


def _round_up(x, m):
    return (x + m - 1) // m * m


# --------------------------------------------------------------------------
# Pre-pass: H = x @ W + b ; h1 = H . phi1 ; h2 = H . phi2 (per row)
# --------------------------------------------------------------------------
def gat_project_kernel(x_ref, w_ref, b_ref, p1_ref, p2_ref,
                       hv_ref, h1_ref, h2_ref):
    # H in f32 (feeds the logits, keep full precision); store values in bf16
    # for the downstream MXU matmul.
    h = jnp.dot(x_ref[...], w_ref[...],
                preferred_element_type=jnp.float32) + b_ref[...]
    hv_ref[...] = h.astype(hv_ref.dtype)
    # row-wise dot with phi via elementwise mul + lane reduce (no lane-1 matmul)
    h1_ref[...] = jnp.sum(h * p1_ref[...], axis=-1, keepdims=True)
    h2_ref[...] = jnp.sum(h * p2_ref[...], axis=-1, keepdims=True)


# --------------------------------------------------------------------------
# Attention: tiled online-softmax aggregation
# --------------------------------------------------------------------------
def make_gat_attention_kernel(tk, hv_resident):
    def kernel(mask_ref, h1_ref, h2_ref, hv_ref, o_ref, m_ref, l_ref, acc_ref):
        ki = pl.program_id(1)

        @pl.when(ki == 0)
        def _():
            m_ref[...] = jnp.full_like(m_ref, -jnp.inf)
            l_ref[...] = jnp.zeros_like(l_ref)
            acc_ref[...] = jnp.zeros_like(acc_ref)

        # logits: broadcast (TQ,1) + (1,TK) — no matmul, no transpose.
        # leaky_relu folded as max(s, 0.01*s); single select for the mask.
        s = h1_ref[...] + h2_ref[...]                               # (TQ, TK)
        s = jnp.where(mask_ref[...] != 0, jnp.float32(-9e15),
                      jnp.maximum(s, jnp.float32(0.01) * s))

        if hv_resident:
            # hv is fully VMEM-resident; take this key tile's row slab.
            hv = hv_ref[pl.ds(pl.multiple_of(ki * tk, tk), tk), :]
        else:
            hv = hv_ref[...]

        # Online softmax update.  NOTE: rows whose key tiles so far are fully
        # masked accumulate p=exp(0)=1 "garbage"; it is wiped out later by
        # alpha=exp(-9e15 - m_real)=0, and the +I diagonal guarantees every
        # real row eventually has an unmasked entry.
        m_prev = m_ref[...]
        m_new = jnp.maximum(m_prev, jnp.max(s, axis=1, keepdims=True))
        alpha = jnp.exp(m_prev - m_new)
        p = jnp.exp(s - m_new)
        l_ref[...] = alpha * l_ref[...] + jnp.sum(p, axis=1, keepdims=True)
        # bf16 MXU operands, f32 accumulation.
        acc_ref[...] = alpha * acc_ref[...] + jnp.dot(
            p.astype(hv.dtype), hv, preferred_element_type=jnp.float32)
        m_ref[...] = m_new

        @pl.when(ki == pl.num_programs(1) - 1)
        def _():
            o_ref[...] = (acc_ref[...] *
                          pl.reciprocal(l_ref[...], approx=True)).astype(o_ref.dtype)

    return kernel


# --------------------------------------------------------------------------
# Wrapper
# --------------------------------------------------------------------------
def gat_forward(adj, x, weight, bias, phi, matmul_dtype=jnp.bfloat16):
    f32 = jnp.float32
    N, f_in = x.shape
    D = weight.shape[1]
    d_pad = _round_up(D, 128)          # lane-dense output (>=128 lanes)

    # ---- tile sizes: independent query/key padding; >=2 query tiles so the
    # "parallel" q axis shards across v7x's two TensorCores.
    n128 = _round_up(max(N, 1), 128)
    if n128 <= 1024:
        tk = n128
        n_pad_k = n128
        tq = max(8, n128 // 2)         # multiple of 64 -> valid sublane tile
        n_pad_q = n128                 # two query tiles
    else:
        tq = 512
        n_pad_q = _round_up(N, tq)
        # prefer the bigger key tile unless it increases key padding
        if _round_up(N, 1024) <= _round_up(N, 512):
            tk = 1024
        else:
            tk = 512
        n_pad_k = _round_up(N, tk)

    n_rows = max(n_pad_q, n_pad_k)     # rows of H needed (queries and keys)
    tq_proj = math.gcd(n_rows, 512)    # n_rows is a multiple of 128

    # ---- one-time padding / parameter prep (XLA, O(N*D)) ----
    x_pad = jnp.zeros((n_rows, f_in), f32).at[:N].set(x.astype(f32))
    w_pad = jnp.zeros((f_in, d_pad), f32).at[:, :D].set(weight.astype(f32))
    b_pad = jnp.zeros((1, d_pad), f32).at[0, :D].set(bias.astype(f32))
    phi1_row = jnp.zeros((1, d_pad), f32).at[0, :D].set(phi[:D, 0].astype(f32))
    phi2_row = jnp.zeros((1, d_pad), f32).at[0, :D].set(phi[D:, 0].astype(f32))

    # int8 mask built directly (no padded f32 adjacency copy); padded
    # rows/columns are masked (=1).
    # TODO(synk): hoist mask_i8 out of the layer when adj is reused across
    # layers/iterations; optionally bit-pack to 1 bit/edge on v5e and add
    # block-sparsity skipping via scalar prefetch for sparse graphs.
    eye = jnp.eye(N, dtype=adj.dtype)
    mask_core = ((adj + eye) == 0).astype(jnp.int8)
    mask_i8 = jnp.ones((n_pad_q, n_pad_k), jnp.int8).at[:N, :N].set(mask_core)

    # ---- pre-pass kernel: H (bf16 values), h1 column, h2 column ----
    hv, h1, h2col = pl.pallas_call(
        gat_project_kernel,
        grid=(n_rows // tq_proj,),
        in_specs=[
            pl.BlockSpec((tq_proj, f_in), lambda i: (i, 0)),
            pl.BlockSpec((f_in, d_pad), lambda i: (0, 0)),
            pl.BlockSpec((1, d_pad), lambda i: (0, 0)),
            pl.BlockSpec((1, d_pad), lambda i: (0, 0)),
            pl.BlockSpec((1, d_pad), lambda i: (0, 0)),
        ],
        out_specs=[
            pl.BlockSpec((tq_proj, d_pad), lambda i: (i, 0)),
            pl.BlockSpec((tq_proj, 1), lambda i: (i, 0)),
            pl.BlockSpec((tq_proj, 1), lambda i: (i, 0)),
        ],
        out_shape=[
            jax.ShapeDtypeStruct((n_rows, d_pad), matmul_dtype),
            jax.ShapeDtypeStruct((n_rows, 1), f32),
            jax.ShapeDtypeStruct((n_rows, 1), f32),
        ],
        compiler_params=pltpu.CompilerParams(
            dimension_semantics=("parallel",)),
    )(x_pad, w_pad, b_pad, phi1_row, phi2_row)

    # lane-major key-side logits, produced once (O(N) data)
    h2_row = jnp.transpose(h2col)                      # (1, n_rows)

    # ---- main attention kernel ----
    # Keep H values fully VMEM-resident when they fit (8 MiB cap -> <=16 MiB
    # double-buffered), halving the attention kernel's HBM reads.
    hv_resident = (n_rows * d_pad * jnp.dtype(matmul_dtype).itemsize
                   <= 8 * 1024 * 1024)
    if hv_resident:
        hv_spec = pl.BlockSpec((n_rows, d_pad), lambda qi, ki: (0, 0))
    else:
        hv_spec = pl.BlockSpec((tk, d_pad), lambda qi, ki: (ki, 0))

    out_pad = pl.pallas_call(
        make_gat_attention_kernel(tk, hv_resident),
        grid=(n_pad_q // tq, n_pad_k // tk),
        in_specs=[
            pl.BlockSpec((tq, tk), lambda qi, ki: (qi, ki)),     # int8 mask
            pl.BlockSpec((tq, 1), lambda qi, ki: (qi, 0)),       # h1 column
            pl.BlockSpec((1, tk), lambda qi, ki: (0, ki)),       # h2 row
            hv_spec,                                             # H values
        ],
        out_specs=pl.BlockSpec((tq, d_pad), lambda qi, ki: (qi, 0)),
        out_shape=jax.ShapeDtypeStruct((n_pad_q, d_pad), f32),
        scratch_shapes=[
            pltpu.VMEM((tq, 1), f32),       # running max
            pltpu.VMEM((tq, 1), f32),       # running sum
            pltpu.VMEM((tq, d_pad), f32),   # accumulator
        ],
        compiler_params=pltpu.CompilerParams(
            dimension_semantics=("parallel", "arbitrary"),
            vmem_limit_bytes=48 * 1024 * 1024),
    )(mask_i8, h1, h2_row, hv)

    # TODO(synk): dropout (p=0 -> identity), layer_norm=False, activation=None
    # in the default module config, so they are intentionally identity here.
    return out_pad[:N, :D]


# --------------------------------------------------------------------------
# Pure-JAX reference mirroring the PyTorch forward exactly (f32 end-to-end)
# --------------------------------------------------------------------------
def gat_reference(adj, x, weight, bias, phi):
    H = x @ weight + bias
    N, D = H.shape
    S = H @ phi[:D] + (H @ phi[D:]).T
    S = jnp.where(S >= 0, S, 0.01 * S)
    mask = (adj + jnp.eye(N, dtype=adj.dtype)) == 0
    S = jnp.where(mask, jnp.float32(-9e15), S)
    S = jax.nn.softmax(S, axis=1)
    return S @ H


def xavier_uniform(key, shape):
    fan_in, fan_out = shape[0], shape[1]
    bound = math.sqrt(6.0 / (fan_in + fan_out))
    return jax.random.uniform(key, shape, jnp.float32, minval=-bound, maxval=bound)


def _make_case(key, n, f_in, d):
    k_adj, k_x, k_w, k_phi = jax.random.split(key, 4)
    a = (jax.random.uniform(k_adj, (n, n)) > 0.6).astype(jnp.float32)
    adj = jnp.maximum(a, a.T)                       # symmetric binary adjacency
    x = jax.random.normal(k_x, (n, f_in), dtype=jnp.float32)
    weight = xavier_uniform(k_w, (f_in, d))
    bias = jnp.zeros((d,), dtype=jnp.float32)
    phi = xavier_uniform(k_phi, (2 * d, 1))
    return adj, x, weight, bias, phi


if __name__ == "__main__":
    key = jax.random.PRNGKey(0)
    k1, k2, k3 = jax.random.split(key, 3)
    gat_jit = jax.jit(gat_forward)

    # Small case at the module's natural scale (2 query tiles of 64 rows).
    adj, x, w, b, phi = _make_case(k1, 16, 8, 16)
    out = jax.block_until_ready(gat_jit(adj, x, w, b, phi))
    ref = gat_reference(adj, x, w, b, phi)
    assert out.shape == ref.shape
    # bf16 MXU operands with f32 accumulation -> ~1e-3 level error budget.
    assert jnp.allclose(out, ref, atol=3e-2, rtol=3e-2), "mismatch (N=16)"

    # Medium case: independent q/k padding (640x640 instead of 1024x1024).
    adj, x, w, b, phi = _make_case(k2, 520, 8, 16)
    out = jax.block_until_ready(gat_jit(adj, x, w, b, phi))
    ref = gat_reference(adj, x, w, b, phi)
    assert jnp.allclose(out, ref, atol=3e-2, rtol=3e-2), "mismatch (N=520)"

    # Larger case exercising multiple key tiles (online softmax across ki)
    # and the in-kernel slicing of the VMEM-resident hv.
    adj, x, w, b, phi = _make_case(k3, 1100, 8, 16)
    out = jax.block_until_ready(gat_jit(adj, x, w, b, phi))
    ref = gat_reference(adj, x, w, b, phi)
    assert jnp.allclose(out, ref, atol=3e-2, rtol=3e-2), "mismatch (N=1100)"

    print("KERNEL_OK")
</pallas_src>

<mosaic_0001>
module attributes {stable_mosaic.version = 11 : i64} {
  func.func @kernel(%arg0: i32, %arg1: i32, %arg2: memref<64x128xi8, #tpu.memory_space<vmem>>, %arg3: memref<64x1xf32, #tpu.memory_space<vmem>>, %arg4: memref<1x128xf32, #tpu.memory_space<vmem>>, %arg5: memref<128x128xbf16, #tpu.memory_space<vmem>>, %arg6: memref<64x128xf32, #tpu.memory_space<vmem>>, %arg7: memref<64x1xf32, #tpu.memory_space<vmem>>, %arg8: memref<64x1xf32, #tpu.memory_space<vmem>>, %arg9: memref<64x128xf32, #tpu.memory_space<vmem>>) attributes {dimension_semantics = [#tpu.dimension_semantics<parallel>, #tpu.dimension_semantics<arbitrary>], iteration_bounds = array<i64: 2, 1>, scalar_prefetch = 0 : i64, scratch_operands = 3 : i64, tpu.core_type = #tpu.core_type<tc>, window_params = [{transform_indices = @transform_0, window_bounds = array<i64: 64, 128>}, {transform_indices = @transform_1, window_bounds = array<i64: 64, 1>}, {transform_indices = @transform_2, window_bounds = array<i64: 1, 128>}, {pipeline_mode = #tpu.pipeline_mode<synchronous>, transform_indices = @transform_3, window_bounds = array<i64: 128, 128>}, {transform_indices = @transform_4, window_bounds = array<i64: 64, 128>}]} {
    %c0_i32 = arith.constant 0 : i32
    %0 = arith.cmpi eq, %arg1, %c0_i32 : i32
    %1 = arith.extui %0 : i1 to i32
    %c0_i32_0 = arith.constant 0 : i32
    %2 = arith.cmpi ne, %1, %c0_i32_0 : i32
    scf.if %2 {
      %cst_25 = arith.constant 0xFF800000 : f32
      %46 = vector.broadcast %cst_25 : f32 to vector<64x1xf32>
      %c0_26 = arith.constant 0 : index
      %c0_27 = arith.constant 0 : index
      %47 = vector.load %arg7[%c0_26, %c0_27] : memref<64x1xf32, #tpu.memory_space<vmem>>, vector<64x1xf32>
      tpu.vector_store %arg7[%c0_26, %c0_27], %46 {strides = array<i32>} : memref<64x1xf32, #tpu.memory_space<vmem>>, vector<64x1xf32>,
      %cst_28 = arith.constant 0.000000e+00 : f32
      %48 = vector.broadcast %cst_28 : f32 to vector<64x1xf32>
      %c0_29 = arith.constant 0 : index
      %c0_30 = arith.constant 0 : index
      %49 = vector.load %arg8[%c0_29, %c0_30] : memref<64x1xf32, #tpu.memory_space<vmem>>, vector<64x1xf32>
      tpu.vector_store %arg8[%c0_29, %c0_30], %48 {strides = array<i32>} : memref<64x1xf32, #tpu.memory_space<vmem>>, vector<64x1xf32>,
      %cst_31 = arith.constant 0.000000e+00 : f32
      %50 = vector.broadcast %cst_31 : f32 to vector<64x128xf32>
      %c0_32 = arith.constant 0 : index
      %c0_33 = arith.constant 0 : index
      %51 = vector.load %arg9[%c0_32, %c0_33] : memref<64x128xf32, #tpu.memory_space<vmem>>, vector<64x128xf32>
      tpu.vector_store %arg9[%c0_32, %c0_33], %50 {strides = array<i32>} : memref<64x128xf32, #tpu.memory_space<vmem>>, vector<64x128xf32>,
    } else {
    }
    %c0 = arith.constant 0 : index
    %c0_1 = arith.constant 0 : index
    %3 = vector.load %arg3[%c0, %c0_1] : memref<64x1xf32, #tpu.memory_space<vmem>>, vector<64x1xf32>
    %c0_2 = arith.constant 0 : index
    %c0_3 = arith.constant 0 : index
    %4 = vector.load %arg4[%c0_2, %c0_3] : memref<1x128xf32, #tpu.memory_space<vmem>>, vector<1x128xf32>
    %5 = vector.broadcast %3 : vector<64x1xf32> to vector<64x128xf32>
    %6 = vector.broadcast %4 : vector<1x128xf32> to vector<64x128xf32>
    %7 = arith.addf %5, %6 : vector<64x128xf32>
    %c0_4 = arith.constant 0 : index
    %c0_5 = arith.constant 0 : index
    %8 = vector.load %arg2[%c0_4, %c0_5] : memref<64x128xi8, #tpu.memory_space<vmem>>, vector<64x128xi8>
    %c0_i8 = arith.constant 0 : i8
    %9 = vector.broadcast %c0_i8 : i8 to vector<64x128xi8>
    %10 = arith.cmpi ne, %8, %9 : vector<64x128xi8>
    %cst = arith.constant 0.00999999977 : f32
    %11 = vector.broadcast %cst : f32 to vector<64x128xf32>
    %12 = arith.mulf %11, %7 : vector<64x128xf32>
    %13 = arith.maximumf %7, %12 : vector<64x128xf32>
    %cst_6 = arith.constant -9.000000e+15 : f32
    %14 = vector.broadcast %cst_6 : f32 to vector<64x128xf32>
    %15 = arith.select %10, %14, %13 : vector<64x128xi1>, vector<64x128xf32>
    %c128_i32 = arith.constant 128 : i32
    %16 = arith.muli %arg1, %c128_i32 : i32
    %17 = tpu.assume_multiple %16, 128 : i32
    %18 = arith.index_cast %17 : i32 to index
    %c0_7 = arith.constant 0 : index
    %19 = vector.load %arg5[%18, %c0_7] : memref<128x128xbf16, #tpu.memory_space<vmem>>, vector<128x128xbf16>
    %c0_8 = arith.constant 0 : index
    %c0_9 = arith.constant 0 : index
    %20 = vector.load %arg7[%c0_8, %c0_9] : memref<64x1xf32, #tpu.memory_space<vmem>>, vector<64x1xf32>
    %cst_10 = arith.constant dense<0xFF800000> : vector<64xf32>
    %21 = vector.multi_reduction <maximumf>, %15, %cst_10 [1] : vector<64x128xf32> to vector<64xf32>
    %22 = vector.shape_cast %21 : vector<64xf32> to vector<64x1xf32>
    %23 = arith.maximumf %20, %22 : vector<64x1xf32>
    %24 = arith.subf %20, %23 : vector<64x1xf32>
    %25 = math.exp %24 : vector<64x1xf32>
    %26 = vector.broadcast %23 : vector<64x1xf32> to vector<64x128xf32>
    %27 = arith.subf %15, %26 : vector<64x128xf32>
    %28 = math.exp %27 : vector<64x128xf32>
    %c0_11 = arith.constant 0 : index
    %c0_12 = arith.constant 0 : index
    %29 = vector.load %arg8[%c0_11, %c0_12] : memref<64x1xf32, #tpu.memory_space<vmem>>, vector<64x1xf32>
    %30 = arith.mulf %25, %29 : vector<64x1xf32>
    %cst_13 = arith.constant dense<0.000000e+00> : vector<64xf32>
    %31 = vector.multi_reduction <add>, %28, %cst_13 [1] : vector<64x128xf32> to vector<64xf32>
    %32 = vector.shape_cast %31 : vector<64xf32> to vector<64x1xf32>
    %33 = arith.addf %30, %32 : vector<64x1xf32>
    %c0_14 = arith.constant 0 : index
    %c0_15 = arith.constant 0 : index
    %34 = vector.load %arg8[%c0_14, %c0_15] : memref<64x1xf32, #tpu.memory_space<vmem>>, vector<64x1xf32>
    tpu.vector_store %arg8[%c0_14, %c0_15], %33 {strides = array<i32>} : memref<64x1xf32, #tpu.memory_space<vmem>>, vector<64x1xf32>,
    %c0_16 = arith.constant 0 : index
    %c0_17 = arith.constant 0 : index
    %35 = vector.load %arg9[%c0_16, %c0_17] : memref<64x128xf32, #tpu.memory_space<vmem>>, vector<64x128xf32>
    %36 = vector.broadcast %25 : vector<64x1xf32> to vector<64x128xf32>
    %37 = arith.mulf %36, %35 : vector<64x128xf32>
    %38 = arith.truncf %28 : vector<64x128xf32> to vector<64x128xbf16>
    %cst_18 = arith.constant dense<0.000000e+00> : vector<64x128xf32>
    %39 = tpu.matmul %38, %19, %cst_18 {dimension_numbers = #tpu.dot_dimension_numbers<[1], [0], [0], [1], [0, 0, 1, 1], [], []>} : vector<64x128xbf16>, vector<128x128xbf16>, vector<64x128xf32> -> vector<64x128xf32>
    %40 = arith.addf %37, %39 : vector<64x128xf32>
    %c0_19 = arith.constant 0 : index
    %c0_20 = arith.constant 0 : index
    %41 = vector.load %arg9[%c0_19, %c0_20] : memref<64x128xf32, #tpu.memory_space<vmem>>, vector<64x128xf32>
    tpu.vector_store %arg9[%c0_19, %c0_20], %40 {strides = array<i32>} : memref<64x128xf32, #tpu.memory_space<vmem>>, vector<64x128xf32>,
    %c0_21 = arith.constant 0 : index
    %c0_22 = arith.constant 0 : index
    %42 = vector.load %arg7[%c0_21, %c0_22] : memref<64x1xf32, #tpu.memory_space<vmem>>, vector<64x1xf32>
    tpu.vector_store %arg7[%c0_21, %c0_22], %23 {strides = array<i32>} : memref<64x1xf32, #tpu.memory_space<vmem>>, vector<64x1xf32>,
    %c0_i32_23 = arith.constant 0 : i32
    %43 = arith.cmpi eq, %arg1, %c0_i32_23 : i32
    %44 = arith.extui %43 : i1 to i32
    %c0_i32_24 = arith.constant 0 : i32
    %45 = arith.cmpi ne, %44, %c0_i32_24 : i32
    scf.if %45 {
      %c0_25 = arith.constant 0 : index
      %c0_26 = arith.constant 0 : index
      %46 = vector.load %arg9[%c0_25, %c0_26] : memref<64x128xf32, #tpu.memory_space<vmem>>, vector<64x128xf32>
      %c0_27 = arith.constant 0 : index
      %c0_28 = arith.constant 0 : index
      %47 = vector.load %arg8[%c0_27, %c0_28] : memref<64x1xf32, #tpu.memory_space<vmem>>, vector<64x1xf32>
      %48 = tpu.reciprocal %47 {approx = true} : vector<64x1xf32> -> vector<64x1xf32>
      %49 = vector.broadcast %48 : vector<64x1xf32> to vector<64x128xf32>
      %50 = arith.mulf %46, %49 : vector<64x128xf32>
      %c0_29 = arith.constant 0 : index
      %c0_30 = arith.constant 0 : index
      %51 = vector.load %arg6[%c0_29, %c0_30] : memref<64x128xf32, #tpu.memory_space<vmem>>, vector<64x128xf32>
      tpu.vector_store %arg6[%c0_29, %c0_30], %50 {strides = array<i32>} : memref<64x128xf32, #tpu.memory_space<vmem>>, vector<64x128xf32>,
    } else {
    }
    return
  }
  func.func @transform_0(%arg0: i32, %arg1: i32) -> (i32, i32) {
    %c0_i32 = arith.constant 0 : i32
    return %arg0, %arg1 : i32, i32
  }
  func.func @transform_1(%arg0: i32, %arg1: i32) -> (i32, i32) {
    %c0_i32 = arith.constant 0 : i32
    %c0_i32_0 = arith.constant 0 : i32
    return %arg0, %c0_i32 : i32, i32
  }
  func.func @transform_2(%arg0: i32, %arg1: i32) -> (i32, i32) {
    %c0_i32 = arith.constant 0 : i32
    %c0_i32_0 = arith.constant 0 : i32
    return %c0_i32, %arg1 : i32, i32
  }
  func.func @transform_3(%arg0: i32, %arg1: i32) -> (i32, i32) {
    %c0_i32 = arith.constant 0 : i32
    %c0_i32_0 = arith.constant 0 : i32
    %c0_i32_1 = arith.constant 0 : i32
    return %c0_i32, %c0_i32_0 : i32, i32
  }
  func.func @transform_4(%arg0: i32, %arg1: i32) -> (i32, i32) {
    %c0_i32 = arith.constant 0 : i32
    %c0_i32_0 = arith.constant 0 : i32
    return %arg0, %c0_i32 : i32, i32
  }
}

module attributes {stable_mosaic.version = 11 : i64} {
  func.func @gat_project_kernel(%arg0: i32, %arg1: memref<128x8xf32, #tpu.memory_space<vmem>>, %arg2: memref<8x128xf32, #tpu.memory_space<vmem>>, %arg3: memref<1x128xf32, #tpu.memory_space<vmem>>, %arg4: memref<1x128xf32, #tpu.memory_space<vmem>>, %arg5: memref<1x128xf32, #tpu.memory_space<vmem>>, %arg6: memref<128x128xbf16, #tpu.memory_space<vmem>>, %arg7: memref<128x1xf32, #tpu.memory_space<vmem>>, %arg8: memref<128x1xf32, #tpu.memory_space<vmem>>) attributes {dimension_semantics = [#tpu.dimension_semantics<parallel>], iteration_bounds = array<i64: 1>, scalar_prefetch = 0 : i64, scratch_operands = 0 : i64, tpu.core_type = #tpu.core_type<tc>, window_params = [{transform_indices = @transform_0, window_bounds = array<i64: 128, 8>}, {pipeline_mode = #tpu.pipeline_mode<synchronous>, transform_indices = @transform_1, window_bounds = array<i64: 8, 128>}, {pipeline_mode = #tpu.pipeline_mode<synchronous>, transform_indices = @transform_2, window_bounds = array<i64: 1, 128>}, {pipeline_mode = #tpu.pipeline_mode<synchronous>, transform_indices = @transform_3, window_bounds = array<i64: 1, 128>}, {pipeline_mode = #tpu.pipeline_mode<synchronous>, transform_indices = @transform_4, window_bounds = array<i64: 1, 128>}, {transform_indices = @transform_5, window_bounds = array<i64: 128, 128>}, {transform_indices = @transform_6, window_bounds = array<i64: 128, 1>}, {transform_indices = @transform_7, window_bounds = array<i64: 128, 1>}]} {
    %c0 = arith.constant 0 : index
    %c0_0 = arith.constant 0 : index
    %0 = vector.load %arg1[%c0, %c0_0] : memref<128x8xf32, #tpu.memory_space<vmem>>, vector<128x8xf32>
    %c0_1 = arith.constant 0 : index
    %c0_2 = arith.constant 0 : index
    %1 = vector.load %arg2[%c0_1, %c0_2] : memref<8x128xf32, #tpu.memory_space<vmem>>, vector<8x128xf32>
    %cst = arith.constant dense<0.000000e+00> : vector<128x128xf32>
    %2 = tpu.matmul %0, %1, %cst {dimension_numbers = #tpu.dot_dimension_numbers<[1], [0], [0], [1], [0, 0, 1, 1], [], []>} : vector<128x8xf32>, vector<8x128xf32>, vector<128x128xf32> -> vector<128x128xf32>
    %c0_3 = arith.constant 0 : index
    %c0_4 = arith.constant 0 : index
    %3 = vector.load %arg3[%c0_3, %c0_4] : memref<1x128xf32, #tpu.memory_space<vmem>>, vector<1x128xf32>
    %4 = vector.broadcast %3 : vector<1x128xf32> to vector<128x128xf32>
    %5 = arith.addf %2, %4 : vector<128x128xf32>
    %6 = arith.truncf %5 : vector<128x128xf32> to vector<128x128xbf16>
    %c0_5 = arith.constant 0 : index
    %c0_6 = arith.constant 0 : index
    %7 = vector.load %arg6[%c0_5, %c0_6] : memref<128x128xbf16, #tpu.memory_space<vmem>>, vector<128x128xbf16>
    tpu.vector_store %arg6[%c0_5, %c0_6], %6 {strides = array<i32>} : memref<128x128xbf16, #tpu.memory_space<vmem>>, vector<128x128xbf16>,
    %c0_7 = arith.constant 0 : index
    %c0_8 = arith.constant 0 : index
    %8 = vector.load %arg4[%c0_7, %c0_8] : memref<1x128xf32, #tpu.memory_space<vmem>>, vector<1x128xf32>
    %9 = vector.broadcast %8 : vector<1x128xf32> to vector<128x128xf32>
    %10 = arith.mulf %5, %9 : vector<128x128xf32>
    %cst_9 = arith.constant dense<0.000000e+00> : vector<128xf32>
    %11 = vector.multi_reduction <add>, %10, %cst_9 [1] : vector<128x128xf32> to vector<128xf32>
    %12 = vector.shape_cast %11 : vector<128xf32> to vector<128x1xf32>
    %c0_10 = arith.constant 0 : index
    %c0_11 = arith.constant 0 : index
    %13 = vector.load %arg7[%c0_10, %c0_11] : memref<128x1xf32, #tpu.memory_space<vmem>>, vector<128x1xf32>
    tpu.vector_store %arg7[%c0_10, %c0_11], %12 {strides = array<i32>} : memref<128x1xf32, #tpu.memory_space<vmem>>, vector<128x1xf32>,
    %c0_12 = arith.constant 0 : index
    %c0_13 = arith.constant 0 : index
    %14 = vector.load %arg5[%c0_12, %c0_13] : memref<1x128xf32, #tpu.memory_space<vmem>>, vector<1x128xf32>
    %15 = vector.broadcast %14 : vector<1x128xf32> to vector<128x128xf32>
    %16 = arith.mulf %5, %15 : vector<128x128xf32>
    %cst_14 = arith.constant dense<0.000000e+00> : vector<128xf32>
    %17 = vector.multi_reduction <add>, %16, %cst_14 [1] : vector<128x128xf32> to vector<128xf32>
    %18 = vector.shape_cast %17 : vector<128xf32> to vector<128x1xf32>
    %c0_15 = arith.constant 0 : index
    %c0_16 = arith.constant 0 : index
    %19 = vector.load %arg8[%c0_15, %c0_16] : memref<128x1xf32, #tpu.memory_space<vmem>>, vector<128x1xf32>
    tpu.vector_store %arg8[%c0_15, %c0_16], %18 {strides = array<i32>} : memref<128x1xf32, #tpu.memory_space<vmem>>, vector<128x1xf32>,
    return
  }
  func.func @transform_0(%arg0: i32) -> (i32, i32) {
    %c0_i32 = arith.constant 0 : i32
    %c0_i32_0 = arith.constant 0 : i32
    return %arg0, %c0_i32 : i32, i32
  }
  func.func @transform_1(%arg0: i32) -> (i32, i32) {
    %c0_i32 = arith.constant 0 : i32
    %c0_i32_0 = arith.constant 0 : i32
    %c0_i32_1 = arith.constant 0 : i32
    return %c0_i32, %c0_i32_0 : i32, i32
  }
  func.func @transform_2(%arg0: i32) -> (i32, i32) {
    %c0_i32 = arith.constant 0 : i32
    %c0_i32_0 = arith.constant 0 : i32
    %c0_i32_1 = arith.constant 0 : i32
    return %c0_i32, %c0_i32_0 : i32, i32
  }
  func.func @transform_3(%arg0: i32) -> (i32, i32) {
    %c0_i32 = arith.constant 0 : i32
    %c0_i32_0 = arith.constant 0 : i32
    %c0_i32_1 = arith.constant 0 : i32
    return %c0_i32, %c0_i32_0 : i32, i32
  }
  func.func @transform_4(%arg0: i32) -> (i32, i32) {
    %c0_i32 = arith.constant 0 : i32
    %c0_i32_0 = arith.constant 0 : i32
    %c0_i32_1 = arith.constant 0 : i32
    return %c0_i32, %c0_i32_0 : i32, i32
  }
  func.func @transform_5(%arg0: i32) -> (i32, i32) {
    %c0_i32 = arith.constant 0 : i32
    %c0_i32_0 = arith.constant 0 : i32
    return %arg0, %c0_i32 : i32, i32
  }
  func.func @transform_6(%arg0: i32) -> (i32, i32) {
    %c0_i32 = arith.constant 0 : i32
    %c0_i32_0 = arith.constant 0 : i32
    return %arg0, %c0_i32 : i32, i32
  }
  func.func @transform_7(%arg0: i32) -> (i32, i32) {
    %c0_i32 = arith.constant 0 : i32
    %c0_i32_0 = arith.constant 0 : i32
    return %arg0, %c0_i32 : i32, i32
  }
}

</mosaic_0001>

<llo_original>
// kernel: gat_forward.2
$region0: #{gat_forward.2}
  #allocation0 [shape = 'u32[]', space=smem, size = 0x4, offset = 0x4, fixed_abs, tag = 'smem constant byte address 0x4 - core index']
  #allocation1 [shape = 'u32[144,128]{1,0:T(1,128)}', space=vmem, size = 0x12000, scoped, tag = 'internal scratch']
  %s0 = inlined_call_operand.vmem [shape: f32[128,8], index: 0, kind: input, shape index: {}]
  %s1 = inlined_call_operand.vmem [shape: f32[8,128], index: 1, kind: input, shape index: {}]
  %s2 = inlined_call_operand.vmem [shape: f32[1,128], index: 2, kind: input, shape index: {}]
  %s3 = inlined_call_operand.vmem [shape: f32[1,128], index: 3, kind: input, shape index: {}]
  %s4 = inlined_call_operand.vmem [shape: f32[1,128], index: 4, kind: input, shape index: {}]
  %s5 = inlined_call_operand.vmem [shape: bf16[128,128], index: 5, kind: output, shape index: {0}]
  %s6 = inlined_call_operand.vmem [shape: f32[128,1], index: 6, kind: output, shape index: {1}]
  %s7 = inlined_call_operand.vmem [shape: f32[128,1], index: 7, kind: output, shape index: {2}]
  %8 = xla_tuple %s5, %s6, %s7
  %s9 = sld [smem:[#allocation0]]
  $region46: #{gat_forward.2} parent=0
    _
  %s11 = ssub.s32 1, %s9
  %s12 = scalar_select 0, %s11, %s9
  // Predicated region
  $region2: #{gat_forward.2} parent=0 // pred_check
    _
  $region3: #{gat_forward.2} parent=0 // pred_check_branch
    %14 = sbr.rel (0) target = $region5
  $region4: #{gat_forward.2} parent=0 // pred_region
    _
  $region5: #{gat_forward.2} parent=0 // pred_fallthru
    _
  // Predicated region
  $region6: #{gat_forward.2} parent=0 // pred_check
    _
  $region7: #{gat_forward.2} parent=0 // pred_check_branch
    %16 = sbr.rel (0) target = $region9
  $region8: #{gat_forward.2} parent=0 // pred_region
    _
  $region9: #{gat_forward.2} parent=0 // pred_fallthru
    _
  // Predicated region
  $region10: #{gat_forward.2} parent=0 // pred_check
    _
  $region11: #{gat_forward.2} parent=0 // pred_check_branch
    %18 = sbr.rel (0) target = $region13
  $region12: #{gat_forward.2} parent=0 // pred_region
    _
  $region13: #{gat_forward.2} parent=0 // pred_fallthru
    _
  // Predicated region
  $region14: #{gat_forward.2} parent=0 // pred_check
    _
  $region15: #{gat_forward.2} parent=0 // pred_check_branch
    %20 = sbr.rel (0) target = $region17
  $region16: #{gat_forward.2} parent=0 // pred_region
    _
  $region17: #{gat_forward.2} parent=0 // pred_fallthru
    _
  // Predicated region
  $region18: #{gat_forward.2} parent=0 // pred_check
    _
  $region19: #{gat_forward.2} parent=0 // pred_check_branch
    %22 = sbr.rel (0) target = $region21
  $region20: #{gat_forward.2} parent=0 // pred_region
    _
  $region21: #{gat_forward.2} parent=0 // pred_fallthru
    _
  %v23 = vld [vmem:[%s0] sm:$0xff]
  %v24 = vld [vmem:[%s0 + $0x8] sm:$0xff]
  %v25 = vld [vmem:[%s0 + $0x10] sm:$0xff]
  %v26 = vld [vmem:[%s0 + $0x18] sm:$0xff]
  %v27 = vld [vmem:[%s0 + $0x20] sm:$0xff]
  %v28 = vld [vmem:[%s0 + $0x28] sm:$0xff]
  %v29 = vld [vmem:[%s0 + $0x30] sm:$0xff]
  %v30 = vld [vmem:[%s0 + $0x38] sm:$0xff]
  %v31 = vld [vmem:[%s0 + $0x40] sm:$0xff]
  %v32 = vld [vmem:[%s0 + $0x48] sm:$0xff]
  %v33 = vld [vmem:[%s0 + $0x50] sm:$0xff]
  %v34 = vld [vmem:[%s0 + $0x58] sm:$0xff]
  %v35 = vld [vmem:[%s0 + $0x60] sm:$0xff]
  %v36 = vld [vmem:[%s0 + $0x68] sm:$0xff]
  %v37 = vld [vmem:[%s0 + $0x70] sm:$0xff]
  %v38 = vld [vmem:[%s0 + $0x78] sm:$0xff]
  %v39 = vld [vmem:[%s1] sm:$0xff]
  %v40 = vld [vmem:[%s2] sm:$0x1]
  %v42 = vlaneseq
  %v43 = vshrl.u32 %v42, 7
  %v44 = vsub.s32 0, %v43
  %v45 = vrot.slane %v40, %v44
  %vm47 = vcmask 64512
  %v49 = vsel %vm47, %v23, 0
  %v52 = vsel %vm47, %v24, 0
  %v55 = vsel %vm47, %v25, 0
  %v58 = vsel %vm47, %v26, 0
  %v61 = vsel %vm47, %v27, 0
  %v64 = vsel %vm47, %v28, 0
  %v67 = vsel %vm47, %v29, 0
  %v70 = vsel %vm47, %v30, 0
  %v73 = vsel %vm47, %v31, 0
  %v76 = vsel %vm47, %v32, 0
  %v79 = vsel %vm47, %v33, 0
  %v82 = vsel %vm47, %v34, 0
  %v85 = vsel %vm47, %v35, 0
  %v88 = vsel %vm47, %v36, 0
  %v91 = vsel %vm47, %v37, 0
  %v94 = vsel %vm47, %v38, 0
  %96 = vmatprep.subr.mxu0 0.0
  %97 = vmatpush1.msra.mxu0 %v39
  %98 = vmatprep.subr.mxu0 0.0
  %99 = vmatpush1.msra.mxu0 0.0
  %100 = vmatprep.subr.mxu0 0.0
  %101 = vmatpush1.msra.mxu0 0.0
  %102 = vmatprep.subr.mxu0 0.0
  %103 = vmatpush1.msra.mxu0 0.0
  %104 = vmatprep.subr.mxu0 0.0
  %105 = vmatpush1.msra.mxu0 0.0
  %106 = vmatprep.subr.mxu0 0.0
  %107 = vmatpush1.msra.mxu0 0.0
  %108 = vmatprep.subr.mxu0 0.0
  %109 = vmatpush1.msra.mxu0 0.0
  %110 = vmatprep.subr.mxu0 0.0
  %111 = vmatpush1.msra.mxu0 0.0
  %112 = vmatprep.subr.mxu0 0.0
  %113 = vmatpush1.msra.mxu0 0.0
  %114 = vmatprep.subr.mxu0 0.0
  %115 = vmatpush1.msra.mxu0 0.0
  %116 = vmatprep.subr.mxu0 0.0
  %117 = vmatpush1.msra.mxu0 0.0
  %118 = vmatprep.subr.mxu0 0.0
  %119 = vmatpush1.msra.mxu0 0.0
  %120 = vmatprep.subr.mxu0 0.0
  %121 = vmatpush1.msra.mxu0 0.0
  %122 = vmatprep.subr.mxu0 0.0
  %123 = vmatpush1.msra.mxu0 0.0
  %124 = vmatprep.subr.mxu0 0.0
  %125 = vmatpush1.msra.mxu0 0.0
  %126 = vmatprep.subr.mxu0 0.0
  %127 = vmatpush1.msra.mxu0 0.0
  %128 = vmatprep.subr.mxu0 0.0
  %129 = vmatpush1.msra.mxu0 0.0
  %130 = vmatprep.subr.mxu0 0.0
  %131 = vmatpush1.msra.mxu0 0.0
  %132 = vmatprep.subr.mxu0 0.0
  %133 = vmatpush1.msra.mxu0 0.0
  %134 = vmatprep.subr.mxu0 0.0
  %135 = vmatpush1.msra.mxu0 0.0
  %136 = vmatprep.subr.mxu0 0.0
  %137 = vmatpush1.msra.mxu0 0.0
  %138 = vmatprep.subr.mxu0 0.0
  %139 = vmatpush1.msra.mxu0 0.0
  %140 = vmatprep.subr.mxu0 0.0
  %141 = vmatpush1.msra.mxu0 0.0
  %142 = vmatprep.subr.mxu0 0.0
  %143 = vmatpush1.msra.mxu0 0.0
  %144 = vmatprep.subr.mxu0 0.0
  %145 = vmatpush1.msra.mxu0 0.0
  %146 = vmatprep.subr.mxu0 0.0
  %147 = vmatpush1.msra.mxu0 0.0
  %148 = vmatprep.subr.mxu0 0.0
  %149 = vmatpush1.msra.mxu0 0.0
  %150 = vmatprep.subr.mxu0 0.0
  %151 = vmatpush1.msra.mxu0 0.0
  %152 = vmatprep.subr.mxu0 0.0
  %153 = vmatpush1.msra.mxu0 0.0
  %154 = vmatprep.subr.mxu0 0.0
  %155 = vmatpush1.msra.mxu0 0.0
  %156 = vmatprep.subr.mxu0 0.0
  %157 = vmatpush1.msra.mxu0 0.0
  %158 = vmatprep.subr.mxu0 0.0
  %159 = vmatpush1.msra.mxu0 0.0
  %160 = vmatprep.mubr.f32.mxu0 0.0
  %161 = vmatmul.mubr.f32.gmra.mrb[0].mxu0 %v49
  %v162 = vpop.f32.mrb[0].mxu0
  %v163 = vadd.f32 %v45, %v162
  %v164 = vpop.f32.mrb[0].mxu0
  %165 = vmatprep.mubr.f32.mxu0 0.0
  %166 = vmatmul.mubr.f32.gmra.mrb[0].mxu0 %v52
  %v167 = vpop.f32.mrb[0].mxu0
  %v168 = vadd.f32 %v45, %v167
  %v169 = vpop.f32.mrb[0].mxu0
  %170 = vmatprep.mubr.f32.mxu0 0.0
  %171 = vmatmul.mubr.f32.gmra.mrb[0].mxu0 %v55
  %v172 = vpop.f32.mrb[0].mxu0
  %v173 = vadd.f32 %v45, %v172
  %v174 = vpop.f32.mrb[0].mxu0
  %175 = vmatprep.mubr.f32.mxu0 0.0
  %176 = vmatmul.mubr.f32.gmra.mrb[0].mxu0 %v58
  %v177 = vpop.f32.mrb[0].mxu0
  %v178 = vadd.f32 %v45, %v177
  %v179 = vpop.f32.mrb[0].mxu0
  %180 = vmatprep.mubr.f32.mxu0 0.0
  %181 = vmatmul.mubr.f32.gmra.mrb[0].mxu0 %v61
  %v182 = vpop.f32.mrb[0].mxu0
  %v183 = vadd.f32 %v45, %v182
  %v184 = vpop.f32.mrb[0].mxu0
  %185 = vmatprep.mubr.f32.mxu0 0.0
  %186 = vmatmul.mubr.f32.gmra.mrb[0].mxu0 %v64
  %v187 = vpop.f32.mrb[0].mxu0
  %v188 = vadd.f32 %v45, %v187
  %v189 = vpop.f32.mrb[0].mxu0
  %190 = vmatprep.mubr.f32.mxu0 0.0
  %191 = vmatmul.mubr.f32.gmra.mrb[0].mxu0 %v67
  %v192 = vpop.f32.mrb[0].mxu0
  %v193 = vadd.f32 %v45, %v192
  %v194 = vpop.f32.mrb[0].mxu0
  %195 = vmatprep.mubr.f32.mxu0 0.0
  %196 = vmatmul.mubr.f32.gmra.mrb[0].mxu0 %v70
  %v197 = vpop.f32.mrb[0].mxu0
  %v198 = vadd.f32 %v45, %v197
  %v199 = vpop.f32.mrb[0].mxu0
  %200 = vmatprep.mubr.f32.mxu0 0.0
  %201 = vmatmul.mubr.f32.gmra.mrb[0].mxu0 %v73
  %v202 = vpop.f32.mrb[0].mxu0
  %v203 = vadd.f32 %v45, %v202
  %v204 = vpop.f32.mrb[0].mxu0
  %205 = vmatprep.mubr.f32.mxu0 0.0
  %206 = vmatmul.mubr.f32.gmra.mrb[0].mxu0 %v76
  %v207 = vpop.f32.mrb[0].mxu0
  %v208 = vadd.f32 %v45, %v207
  %v209 = vpop.f32.mrb[0].mxu0
  %210 = vmatprep.mubr.f32.mxu0 0.0
  %211 = vmatmul.mubr.f32.gmra.mrb[0].mxu0 %v79
  %v212 = vpop.f32.mrb[0].mxu0
  %v213 = vadd.f32 %v45, %v212
  %v214 = vpop.f32.mrb[0].mxu0
  %215 = vmatprep.mubr.f32.mxu0 0.0
  %216 = vmatmul.mubr.f32.gmra.mrb[0].mxu0 %v82
  %v217 = vpop.f32.mrb[0].mxu0
  %v218 = vadd.f32 %v45, %v217
  %v219 = vpop.f32.mrb[0].mxu0
  %220 = vmatprep.mubr.f32.mxu0 0.0
  %221 = vmatmul.mubr.f32.gmra.mrb[0].mxu0 %v85
  %v222 = vpop.f32.mrb[0].mxu0
  %v223 = vadd.f32 %v45, %v222
  %v224 = vpop.f32.mrb[0].mxu0
  %225 = vmatprep.mubr.f32.mxu0 0.0
  %226 = vmatmul.mubr.f32.gmra.mrb[0].mxu0 %v88
  %v227 = vpop.f32.mrb[0].mxu0
  %v228 = vadd.f32 %v45, %v227
  %v229 = vpop.f32.mrb[0].mxu0
  %230 = vmatprep.mubr.f32.mxu0 0.0
  %231 = vmatmul.mubr.f32.gmra.mrb[0].mxu0 %v91
  %v232 = vpop.f32.mrb[0].mxu0
  %v233 = vadd.f32 %v45, %v232
  %v234 = vpop.f32.mrb[0].mxu0
  %235 = vmatprep.mubr.f32.mxu0 0.0
  %236 = vmatmul.mubr.f32.gmra.mrb[0].mxu0 %v94
  %v237 = vpop.f32.mrb[0].mxu0
  %v238 = vadd.f32 %v45, %v237
  %v239 = vpop.f32.mrb[0].mxu0
  %240 = vdwg.mxu0
  %v241 = vpack.c.bf16 %v168, %v163
  %v242 = vpack.c.bf16 %v178, %v173
  %v243 = vpack.c.bf16 %v188, %v183
  %v244 = vpack.c.bf16 %v198, %v193
  %v245 = vpack.c.bf16 %v208, %v203
  %v246 = vpack.c.bf16 %v218, %v213
  %v247 = vpack.c.bf16 %v228, %v223
  %v248 = vpack.c.bf16 %v238, %v233
  %v257 = vunpack.c.l.b16 %v241
  %v258 = vunpack.c.h.b16 %v241
  %v259 = vunpack.c.l.b16 %v242
  %v260 = vunpack.c.h.b16 %v242
  %v261 = vunpack.c.l.b16 %v243
  %v262 = vunpack.c.h.b16 %v243
  %v263 = vunpack.c.l.b16 %v244
  %v264 = vunpack.c.h.b16 %v244
  %v265 = vunpack.c.l.b16 %v245
  %v266 = vunpack.c.h.b16 %v245
  %v267 = vunpack.c.l.b16 %v246
  %v268 = vunpack.c.h.b16 %v246
  %v269 = vunpack.c.l.b16 %v247
  %v270 = vunpack.c.h.b16 %v247
  %v271 = vunpack.c.l.b16 %v248
  %v272 = vunpack.c.h.b16 %v248
  %v273 = vpack.c.b16 %v257, %v257
  %v274 = vpack.c.b16 %v258, %v258
  %v275 = vpack.c.b16 %v259, %v259
  %v276 = vpack.c.b16 %v260, %v260
  %v277 = vpack.c.b16 %v261, %v261
  %v278 = vpack.c.b16 %v262, %v262
  %v279 = vpack.c.b16 %v263, %v263
  %v280 = vpack.c.b16 %v264, %v264
  %v281 = vpack.c.b16 %v265, %v265
  %v282 = vpack.c.b16 %v266, %v266
  %v283 = vpack.c.b16 %v267, %v267
  %v284 = vpack.c.b16 %v268, %v268
  %v285 = vpack.c.b16 %v269, %v269
  %v286 = vpack.c.b16 %v270, %v270
  %v287 = vpack.c.b16 %v271, %v271
  %v288 = vpack.c.b16 %v272, %v272
  %305 = vst [vmem:[%s5] sm:$0xf] %v273
  %306 = vst [vmem:[%s5 + $0x4] sm:$0xf] %v274
  %307 = vst [vmem:[%s5 + $0x8] sm:$0xf] %v275
  %308 = vst [vmem:[%s5 + $0xc] sm:$0xf] %v276
  %309 = vst [vmem:[%s5 + $0x10] sm:$0xf] %v277
  %310 = vst [vmem:[%s5 + $0x14] sm:$0xf] %v278
  %311 = vst [vmem:[%s5 + $0x18] sm:$0xf] %v279
  %312 = vst [vmem:[%s5 + $0x1c] sm:$0xf] %v280
  %313 = vst [vmem:[%s5 + $0x20] sm:$0xf] %v281
  %314 = vst [vmem:[%s5 + $0x24] sm:$0xf] %v282
  %315 = vst [vmem:[%s5 + $0x28] sm:$0xf] %v283
  %316 = vst [vmem:[%s5 + $0x2c] sm:$0xf] %v284
  %317 = vst [vmem:[%s5 + $0x30] sm:$0xf] %v285
  %318 = vst [vmem:[%s5 + $0x34] sm:$0xf] %v286
  %319 = vst [vmem:[%s5 + $0x38] sm:$0xf] %v287
  %320 = vst [vmem:[%s5 + $0x3c] sm:$0xf] %v288
  %v321 = vld [vmem:[%s3] sm:$0x1]
  %v323 = vlaneseq
  %v324 = vshrl.u32 %v323, 7
  %v325 = vsub.s32 0, %v324
  %v326 = vrot.slane %v321, %v325
  %v328 = vmul.f32 %v163, %v326
  %v329 = vmul.f32 %v168, %v326
  %v330 = vmul.f32 %v173, %v326
  %v331 = vmul.f32 %v178, %v326
  %v332 = vmul.f32 %v183, %v326
  %v333 = vmul.f32 %v188, %v326
  %v334 = vmul.f32 %v193, %v326
  %v335 = vmul.f32 %v198, %v326
  %v336 = vmul.f32 %v203, %v326
  %v337 = vmul.f32 %v208, %v326
  %v338 = vmul.f32 %v213, %v326
  %v339 = vmul.f32 %v218, %v326
  %v340 = vmul.f32 %v223, %v326
  %v341 = vmul.f32 %v228, %v326
  %v342 = vmul.f32 %v233, %v326
  %v343 = vmul.f32 %v238, %v326
  %344 = vadd.xlane.f32.xlu0 %v328
  %v345 = vpop.xlane.xlu0 %344
  %346 = vadd.xlane.f32.xlu0 %v329
  %v347 = vpop.xlane.xlu0 %346
  %348 = vadd.xlane.f32.xlu0 %v330
  %v349 = vpop.xlane.xlu0 %348
  %350 = vadd.xlane.f32.xlu0 %v331
  %v351 = vpop.xlane.xlu0 %350
  %352 = vadd.xlane.f32.xlu0 %v332
  %v353 = vpop.xlane.xlu0 %352
  %354 = vadd.xlane.f32.xlu0 %v333
  %v355 = vpop.xlane.xlu0 %354
  %356 = vadd.xlane.f32.xlu0 %v334
  %v357 = vpop.xlane.xlu0 %356
  %358 = vadd.xlane.f32.xlu0 %v335
  %v359 = vpop.xlane.xlu0 %358
  %360 = vadd.xlane.f32.xlu0 %v336
  %v361 = vpop.xlane.xlu0 %360
  %362 = vadd.xlane.f32.xlu0 %v337
  %v363 = vpop.xlane.xlu0 %362
  %364 = vadd.xlane.f32.xlu0 %v338
  %v365 = vpop.xlane.xlu0 %364
  %366 = vadd.xlane.f32.xlu0 %v339
  %v367 = vpop.xlane.xlu0 %366
  %368 = vadd.xlane.f32.xlu0 %v340
  %v369 = vpop.xlane.xlu0 %368
  %370 = vadd.xlane.f32.xlu0 %v341
  %v371 = vpop.xlane.xlu0 %370
  %372 = vadd.xlane.f32.xlu0 %v342
  %v373 = vpop.xlane.xlu0 %372
  %374 = vadd.xlane.f32.xlu0 %v343
  %v375 = vpop.xlane.xlu0 %374
  %vm376 = vcmask 7168
  %377 = vst.msk [vmem:[%s6] sm:$0xff] %vm376, %v345
  %378 = vst.msk [vmem:[%s6 + $0x8] sm:$0xff] %vm376, %v347
  %379 = vst.msk [vmem:[%s6 + $0x10] sm:$0xff] %vm376, %v349
  %380 = vst.msk [vmem:[%s6 + $0x18] sm:$0xff] %vm376, %v351
  %381 = vst.msk [vmem:[%s6 + $0x20] sm:$0xff] %vm376, %v353
  %382 = vst.msk [vmem:[%s6 + $0x28] sm:$0xff] %vm376, %v355
  %383 = vst.msk [vmem:[%s6 + $0x30] sm:$0xff] %vm376, %v357
  %384 = vst.msk [vmem:[%s6 + $0x38] sm:$0xff] %vm376, %v359
  %385 = vst.msk [vmem:[%s6 + $0x40] sm:$0xff] %vm376, %v361
  %386 = vst.msk [vmem:[%s6 + $0x48] sm:$0xff] %vm376, %v363
  %387 = vst.msk [vmem:[%s6 + $0x50] sm:$0xff] %vm376, %v365
  %388 = vst.msk [vmem:[%s6 + $0x58] sm:$0xff] %vm376, %v367
  %389 = vst.msk [vmem:[%s6 + $0x60] sm:$0xff] %vm376, %v369
  %390 = vst.msk [vmem:[%s6 + $0x68] sm:$0xff] %vm376, %v371
  %391 = vst.msk [vmem:[%s6 + $0x70] sm:$0xff] %vm376, %v373
  %392 = vst.msk [vmem:[%s6 + $0x78] sm:$0xff] %vm376, %v375
  %v393 = vld [vmem:[%s4] sm:$0x1]
  %v395 = vlaneseq
  %v396 = vshrl.u32 %v395, 7
  %v397 = vsub.s32 0, %v396
  %v398 = vrot.slane %v393, %v397
  %v400 = vmul.f32 %v163, %v398
  %v401 = vmul.f32 %v168, %v398
  %v402 = vmul.f32 %v173, %v398
  %v403 = vmul.f32 %v178, %v398
  %v404 = vmul.f32 %v183, %v398
  %v405 = vmul.f32 %v188, %v398
  %v406 = vmul.f32 %v193, %v398
  %v407 = vmul.f32 %v198, %v398
  %v408 = vmul.f32 %v203, %v398
  %v409 = vmul.f32 %v208, %v398
  %v410 = vmul.f32 %v213, %v398
  %v411 = vmul.f32 %v218, %v398
  %v412 = vmul.f32 %v223, %v398
  %v413 = vmul.f32 %v228, %v398
  %v414 = vmul.f32 %v233, %v398
  %v415 = vmul.f32 %v238, %v398
  %416 = vadd.xlane.f32.xlu0 %v400
  %v417 = vpop.xlane.xlu0 %416
  %418 = vadd.xlane.f32.xlu0 %v401
  %v419 = vpop.xlane.xlu0 %418
  %420 = vadd.xlane.f32.xlu0 %v402
  %v421 = vpop.xlane.xlu0 %420
  %422 = vadd.xlane.f32.xlu0 %v403
  %v423 = vpop.xlane.xlu0 %422
  %424 = vadd.xlane.f32.xlu0 %v404
  %v425 = vpop.xlane.xlu0 %424
  %426 = vadd.xlane.f32.xlu0 %v405
  %v427 = vpop.xlane.xlu0 %426
  %428 = vadd.xlane.f32.xlu0 %v406
  %v429 = vpop.xlane.xlu0 %428
  %430 = vadd.xlane.f32.xlu0 %v407
  %v431 = vpop.xlane.xlu0 %430
  %432 = vadd.xlane.f32.xlu0 %v408
  %v433 = vpop.xlane.xlu0 %432
  %434 = vadd.xlane.f32.xlu0 %v409
  %v435 = vpop.xlane.xlu0 %434
  %436 = vadd.xlane.f32.xlu0 %v410
  %v437 = vpop.xlane.xlu0 %436
  %438 = vadd.xlane.f32.xlu0 %v411
  %v439 = vpop.xlane.xlu0 %438
  %440 = vadd.xlane.f32.xlu0 %v412
  %v441 = vpop.xlane.xlu0 %440
  %442 = vadd.xlane.f32.xlu0 %v413
  %v443 = vpop.xlane.xlu0 %442
  %444 = vadd.xlane.f32.xlu0 %v414
  %v445 = vpop.xlane.xlu0 %444
  %446 = vadd.xlane.f32.xlu0 %v415
  %v447 = vpop.xlane.xlu0 %446
  %448 = vst.msk [vmem:[%s7] sm:$0xff] %vm376, %v417
  %449 = vst.msk [vmem:[%s7 + $0x8] sm:$0xff] %vm376, %v419
  %450 = vst.msk [vmem:[%s7 + $0x10] sm:$0xff] %vm376, %v421
  %451 = vst.msk [vmem:[%s7 + $0x18] sm:$0xff] %vm376, %v423
  %452 = vst.msk [vmem:[%s7 + $0x20] sm:$0xff] %vm376, %v425
  %453 = vst.msk [vmem:[%s7 + $0x28] sm:$0xff] %vm376, %v427
  %454 = vst.msk [vmem:[%s7 + $0x30] sm:$0xff] %vm376, %v429
  %455 = vst.msk [vmem:[%s7 + $0x38] sm:$0xff] %vm376, %v431
  %456 = vst.msk [vmem:[%s7 + $0x40] sm:$0xff] %vm376, %v433
  %457 = vst.msk [vmem:[%s7 + $0x48] sm:$0xff] %vm376, %v435
  %458 = vst.msk [vmem:[%s7 + $0x50] sm:$0xff] %vm376, %v437
  %459 = vst.msk [vmem:[%s7 + $0x58] sm:$0xff] %vm376, %v439
  %460 = vst.msk [vmem:[%s7 + $0x60] sm:$0xff] %vm376, %v441
  %461 = vst.msk [vmem:[%s7 + $0x68] sm:$0xff] %vm376, %v443
  %462 = vst.msk [vmem:[%s7 + $0x70] sm:$0xff] %vm376, %v445
  %463 = vst.msk [vmem:[%s7 + $0x78] sm:$0xff] %vm376, %v447
  // Predicated region
  $region22: #{gat_forward.2} parent=0 // pred_check
    _
  $region23: #{gat_forward.2} parent=0 // pred_check_branch
    %465 = sbr.rel (0) target = $region25
  $region24: #{gat_forward.2} parent=0 // pred_region
    _
  $region25: #{gat_forward.2} parent=0 // pred_fallthru
    _
  // Predicated region
  $region26: #{gat_forward.2} parent=0 // pred_check
    _
  $region27: #{gat_forward.2} parent=0 // pred_check_branch
    %467 = sbr.rel (0) target = $region29
  $region28: #{gat_forward.2} parent=0 // pred_region
    _
  $region29: #{gat_forward.2} parent=0 // pred_fallthru
    _
  // Predicated region
  $region30: #{gat_forward.2} parent=0 // pred_check
    _
  $region31: #{gat_forward.2} parent=0 // pred_check_branch
    %469 = sbr.rel (0) target = $region33
  $region32: #{gat_forward.2} parent=0 // pred_region
    _
  $region33: #{gat_forward.2} parent=0 // pred_fallthru
    _
  // Predicated region
  $region34: #{gat_forward.2} parent=0 // pred_check
    _
  $region35: #{gat_forward.2} parent=0 // pred_check_branch
    %471 = sbr.rel (0) target = $region37
  $region36: #{gat_forward.2} parent=0 // pred_region
    _
  $region37: #{gat_forward.2} parent=0 // pred_fallthru
    _
  // Predicated region
  $region38: #{gat_forward.2} parent=0 // pred_check
    _
  $region39: #{gat_forward.2} parent=0 // pred_check_branch
    %473 = sbr.rel (0) target = $region41
  $region40: #{gat_forward.2} parent=0 // pred_region
    _
  $region41: #{gat_forward.2} parent=0 // pred_fallthru
    _
  // Predicated region
  $region42: #{gat_forward.2} parent=0 // pred_check
    _
  $region43: #{gat_forward.2} parent=0 // pred_check_branch
    %475 = sbr.rel (0) target = $region45
  $region44: #{gat_forward.2} parent=0 // pred_region
    _
  $region45: #{gat_forward.2} parent=0 // pred_fallthru
    _

// kernel: gat_forward.3
$region0: #{gat_forward.3}
  #allocation0 [shape = 'u32[]', space=smem, size = 0x4, offset = 0x4, fixed_abs, tag = 'smem constant byte address 0x4 - core index']
  #allocation1 [shape = 'u32[144,128]{1,0:T(1,128)}', space=vmem, size = 0x12000, scoped, tag = 'internal scratch']
  #allocation2 [shape = 'f32[64,1]{1,0:T(8,128)}', space=vmem, size = 0x8000, scoped, tag = 'scratch operand']
  #allocation3 [shape = 'f32[64,1]{1,0:T(8,128)}', space=vmem, size = 0x8000, scoped, tag = 'scratch operand']
  #allocation4 [shape = 'f32[64,128]{1,0:T(8,128)}', space=vmem, size = 0x8000, scoped, tag = 'scratch operand']
  %s0 = inlined_call_operand.vmem [shape: s8[128,128], index: 0, kind: input, shape index: {}]
  %s1 = inlined_call_operand.vmem [shape: f32[128,1], index: 1, kind: input, shape index: {}]
  %s2 = inlined_call_operand.vmem [shape: f32[1,128], index: 2, kind: input, shape index: {}]
  %s3 = inlined_call_operand.vmem [shape: bf16[128,128], index: 3, kind: input, shape index: {}]
  %s4 = inlined_call_operand.vmem [shape: f32[128,128], index: 4, kind: output, shape index: {}]
  %s5 = sld [smem:[#allocation0]]
  $region57: #{gat_forward.3} parent=0
    _
  %s7 = ssub.s32 1, %s5
  %s8 = scalar_select 0, %s7, %s5
  loop: start=0, step=1, limit=4
  $region2: #{gat_forward.3} parent=0 // loop_pre_header
    _
  $region3: #{gat_forward.3} parent=0 // loop_header
    %s10 = sphi 0, %s14
    %p11 = scmp.ge.s32.totalorder %s10, 4
    %s17 = sphi 0, %s29
    %s18 = sphi 0, %s25
    %s19 = sphi 0, %s17
    %s20 = sphi 0, %s18
    %s21 = sphi 0, %s19
    %s22 = sphi 0, %s20
    %s34 = sphi 0, %s36
    %s37 = sphi 0, %s34
    %s38 = sphi 0, %s37
    %s54 = sphi 0, %s38
    %s60 = sphi 0, %s62
    %s63 = sphi 0, %s60
    %s64 = sphi 0, %s63
    %s80 = sphi 0, %s64
    %s86 = sphi 0, %s88
    %s89 = sphi 0, %s86
    %s90 = sphi 0, %s89
    %s106 = sphi 0, %s90
    %s110 = sphi 0, %s110
    %s112 = sphi 0, %s110
    %s113 = sphi 0, %s112
    %s127 = sphi 0, %s113
    %s133 = sphi 0, %s135
    %s136 = sphi 0, %s133
    %s137 = sphi 0, %s136
    %s153 = sphi 0, %s137
  $region4: #{gat_forward.3} parent=0 // loop_header_branch
    %13 = sbr.rel (%p11) target = $region8
  $region5: #{gat_forward.3} parent=0 // loop_body
    %s15 = ssub.s32 %s10, 1
    %s16 = ssub.s32 %s10, 2
    %s23 = sadd.s32 1, %s18
    %p24 = scmp.ge.s32.totalorder %s23, 1
    %s25 = scalar_select %p24, 0, %s23
    %s26 = sadd.s32 1, %s17
    %s27 = scalar_select %p24, %s26, %s17
    %p28 = scmp.ge.s32.totalorder %s27, 2
    %s29 = scalar_select %p28, 0, %s27
    %s30 = ssub.s32 %s17, %s29
    %s31 = ssub.s32 %s18, %s25
    %s32 = sor.u32 %s30, %s31
    %p33 = scmp.eq.s32.totalorder %s32, 0
    %s35 = sadd.s32 %s34, 1
    %s36 = scalar_select %p33, %s34, %s35
    %p39 = pneg %p33
    %p40 = scmp.eq.s32.totalorder %s10, 1
    %p41 = por %p39, %p40
    %p42 = scmp.ne.s32.totalorder %s34, %s37
    %p43 = scmp.eq.s32.totalorder %s10, 0
    %p44 = por %p42, %p43
    %p45 = scmp.ne.s32.totalorder %s34, %s37
    %p46 = scmp.eq.s32.totalorder %s15, 1
    %p47 = por %p45, %p46
    %p48 = scmp.ne.s32.totalorder %s37, %s38
    %p49 = scmp.eq.s32.totalorder %s15, 0
    %p50 = por %p48, %p49
    %p51 = scmp.ne.s32.totalorder %s37, %s38
    %p52 = scmp.eq.s32.totalorder %s16, 1
    %p53 = por %p51, %p52
    %p55 = scmp.ne.s32.totalorder %s38, %s54
    %p56 = scmp.eq.s32.totalorder %s16, 0
    %p57 = por %p55, %p56
    %s58 = ssub.s32 %s17, %s29
    %p59 = scmp.eq.s32.totalorder %s58, 0
    %s61 = sadd.s32 %s60, 1
    %s62 = scalar_select %p59, %s60, %s61
    %p65 = pneg %p59
    %p66 = scmp.eq.s32.totalorder %s10, 1
    %p67 = por %p65, %p66
    %p68 = scmp.ne.s32.totalorder %s60, %s63
    %p69 = scmp.eq.s32.totalorder %s10, 0
    %p70 = por %p68, %p69
    %p71 = scmp.ne.s32.totalorder %s60, %s63
    %p72 = scmp.eq.s32.totalorder %s15, 1
    %p73 = por %p71, %p72
    %p74 = scmp.ne.s32.totalorder %s63, %s64
    %p75 = scmp.eq.s32.totalorder %s15, 0
    %p76 = por %p74, %p75
    %p77 = scmp.ne.s32.totalorder %s63, %s64
    %p78 = scmp.eq.s32.totalorder %s16, 1
    %p79 = por %p77, %p78
    %p81 = scmp.ne.s32.totalorder %s64, %s80
    %p82 = scmp.eq.s32.totalorder %s16, 0
    %p83 = por %p81, %p82
    %s84 = ssub.s32 %s18, %s25
    %p85 = scmp.eq.s32.totalorder %s84, 0
    %s87 = sadd.s32 %s86, 1
    %s88 = scalar_select %p85, %s86, %s87
    %p91 = pneg %p85
    %p92 = scmp.eq.s32.totalorder %s10, 1
    %p93 = por %p91, %p92
    %p94 = scmp.ne.s32.totalorder %s86, %s89
    %p95 = scmp.eq.s32.totalorder %s10, 0
    %p96 = por %p94, %p95
    %p97 = scmp.ne.s32.totalorder %s86, %s89
    %p98 = scmp.eq.s32.totalorder %s15, 1
    %p99 = por %p97, %p98
    %p100 = scmp.ne.s32.totalorder %s89, %s90
    %p101 = scmp.eq.s32.totalorder %s15, 0
    %p102 = por %p100, %p101
    %p103 = scmp.ne.s32.totalorder %s89, %s90
    %p104 = scmp.eq.s32.totalorder %s16, 1
    %p105 = por %p103, %p104
    %p107 = scmp.ne.s32.totalorder %s90, %s106
    %p108 = scmp.eq.s32.totalorder %s16, 0
    %p109 = por %p107, %p108
    %s111 = sadd.s32 %s110, 1
    %p114 = scmp.eq.s32.totalorder %s10, 1
    %p115 = scmp.ne.s32.totalorder %s110, %s112
    %p116 = scmp.eq.s32.totalorder %s10, 0
    %p117 = por %p115, %p116
    %p118 = scmp.ne.s32.totalorder %s110, %s112
    %p119 = scmp.eq.s32.totalorder %s15, 1
    %p120 = por %p118, %p119
    %p121 = scmp.ne.s32.totalorder %s112, %s113
    %p122 = scmp.eq.s32.totalorder %s15, 0
    %p123 = por %p121, %p122
    %p124 = scmp.ne.s32.totalorder %s112, %s113
    %p125 = scmp.eq.s32.totalorder %s16, 1
    %p126 = por %p124, %p125
    %p128 = scmp.ne.s32.totalorder %s113, %s127
    %p129 = scmp.eq.s32.totalorder %s16, 0
    %p130 = por %p128, %p129
    %s131 = ssub.s32 %s17, %s29
    %p132 = scmp.eq.s32.totalorder %s131, 0
    %s134 = sadd.s32 %s133, 1
    %s135 = scalar_select %p132, %s133, %s134
    %p138 = pneg %p132
    %p139 = scmp.eq.s32.totalorder %s10, 1
    %p140 = por %p138, %p139
    %p141 = scmp.ne.s32.totalorder %s133, %s136
    %p142 = scmp.eq.s32.totalorder %s10, 0
    %p143 = por %p141, %p142
    %p144 = scmp.ne.s32.totalorder %s133, %s136
    %p145 = scmp.eq.s32.totalorder %s15, 1
    %p146 = por %p144, %p145
    %p147 = scmp.ne.s32.totalorder %s136, %s137
    %p148 = scmp.eq.s32.totalorder %s15, 0
    %p149 = por %p147, %p148
    %p150 = scmp.ne.s32.totalorder %s136, %s137
    %p151 = scmp.eq.s32.totalorder %s16, 1
    %p152 = por %p150, %p151
    %p154 = scmp.ne.s32.totalorder %s137, %s153
    %p155 = scmp.eq.s32.totalorder %s16, 0
    %p156 = por %p154, %p155
    %p157 = scmp.le.s32.totalorder 1, %s10
    %p158 = scmp.lt.s32.totalorder %s10, 3
    %p159 = pnand %p157, %p158
    %p160 = pneg %p159
    // Predicated region
    $region9: #{gat_forward.3} parent=5 // pred_check
      _
    $region10: #{gat_forward.3} parent=5 // pred_check_branch
      %162 = sbr.rel (%p159) target = $region12
    $region11: #{gat_forward.3} parent=5 // pred_region
      %s163 = ssub.s32 %s10, 1
      // Predicated region
      $region13: #{gat_forward.3} parent=11 // pred_check
        %p164 = pneg %p102
      $region14: #{gat_forward.3} parent=11 // pred_check_branch
        %166 = sbr.rel (%p164) target = $region16
      $region15: #{gat_forward.3} parent=11 // pred_region
        %p167 = scmp.lt.s32.totalorder %s20, 0
        %s168 = scalar_select %p167, %s20, 0
        %s169 = scalar_lea.vmem %s2, %s168
      $region16: #{gat_forward.3} parent=11 // pred_fallthru
        _
      // Predicated region
      $region17: #{gat_forward.3} parent=11 // pred_check
        %p170 = pneg %p123
      $region18: #{gat_forward.3} parent=11 // pred_check_branch
        %172 = sbr.rel (%p170) target = $region20
      $region19: #{gat_forward.3} parent=11 // pred_region
        _
      $region20: #{gat_forward.3} parent=11 // pred_fallthru
        _
    $region12: #{gat_forward.3} parent=5 // pred_fallthru
      _
    %p173 = scmp.lt.s32.totalorder %s10, 2
    // Predicated region
    $region21: #{gat_forward.3} parent=5 // pred_check
      %p174 = pneg %p173
    $region22: #{gat_forward.3} parent=5 // pred_check_branch
      %176 = sbr.rel (%p174) target = $region24
    $region23: #{gat_forward.3} parent=5 // pred_region
      // Predicated region
      $region25: #{gat_forward.3} parent=23 // pred_check
        %p177 = pneg %p44
      $region26: #{gat_forward.3} parent=23 // pred_check_branch
        %179 = sbr.rel (%p177) target = $region28
      $region27: #{gat_forward.3} parent=23 // pred_region
        %s180 = smul.u32 2, %s17
        %p181 = scmp.lt.s32.totalorder %s180, 3
        %s182 = scalar_select %p181, %s180, 3
        %p183 = scmp.lt.s32.totalorder %s18, 0
        %s184 = scalar_select %p183, %s18, 0
        %s185 = sadd.s32 %s184, %s182
        %s186 = smul.addr %s185, 8
        %s187 = scalar_lea.vmem %s0, %s186
        %s188 = smul.u32 2, %s17
      $region28: #{gat_forward.3} parent=23 // pred_fallthru
        _
      // Predicated region
      $region29: #{gat_forward.3} parent=23 // pred_check
        %p189 = pneg %p70
      $region30: #{gat_forward.3} parent=23 // pred_check_branch
        %191 = sbr.rel (%p189) target = $region32
      $region31: #{gat_forward.3} parent=23 // pred_region
        %s192 = smul.u32 8, %s17
        %p193 = scmp.lt.s32.totalorder %s192, 15
        %s194 = scalar_select %p193, %s192, 15
        %s195 = smul.addr %s194, 8
        %s196 = scalar_lea.vmem %s1, %s195
        %s197 = smul.u32 8, %s17
      $region32: #{gat_forward.3} parent=23 // pred_fallthru
        _
    $region24: #{gat_forward.3} parent=5 // pred_fallthru
      _
    %p198 = scmp.le.s32.totalorder 1, %s10
    %p199 = scmp.lt.s32.totalorder %s10, 3
    %p200 = pnand %p198, %p199
    %p201 = pneg %p200
    // Predicated region
    $region33: #{gat_forward.3} parent=5 // pred_check
      _
    $region34: #{gat_forward.3} parent=5 // pred_check_branch
      %203 = sbr.rel (%p200) target = $region36
    $region35: #{gat_forward.3} parent=5 // pred_region
      %s204 = ssub.s32 %s10, 1
      %s205 = smul.u32 2, %s19
      %p206 = scmp.lt.s32.totalorder %s205, 3
      %s207 = scalar_select %p206, %s205, 3
      %p208 = scmp.lt.s32.totalorder %s20, 0
      %s209 = scalar_select %p208, %s20, 0
      %s210 = sadd.s32 %s209, %s207
      %s211 = smul.addr %s210, 8
      %s212 = scalar_lea.vmem %s0, %s211
      %p213 = pneg %p50
      %p214 = pneg %p47
      %s215 = smul.u32 8, %s19
      %p216 = scmp.lt.s32.totalorder %s215, 15
      %s217 = scalar_select %p216, %s215, 15
      %s218 = smul.addr %s217, 8
      %s219 = scalar_lea.vmem %s1, %s218
      %p220 = pneg %p76
      %p221 = pneg %p73
      %p222 = scmp.lt.s32.totalorder %s20, 0
      %s223 = scalar_select %p222, %s20, 0
      %s224 = scalar_lea.vmem %s2, %s223
      %p225 = pneg %p102
      %p226 = pneg %p99
      %p227 = pneg %p123
      %p228 = pneg %p120
      %p229 = pneg %p149
      %p230 = pneg %p146
      %s231 = smul.u32 8, %s19
      %p232 = scmp.lt.s32.totalorder %s231, 15
      %s233 = scalar_select %p232, %s231, 15
      %s234 = smul.addr %s233, 8
      %s235 = scalar_lea.vmem %s4, %s234
      %s236 = smul.u32 2, %s19
      %p237 = scmp.lt.s32.totalorder %s236, 3
      %s238 = scalar_select %p237, %s236, 3
      %p239 = scmp.lt.s32.totalorder %s20, 0
      %s240 = scalar_select %p239, %s20, 0
      %s241 = sadd.s32 %s240, %s238
      %s242 = smul.addr %s241, 8
      %s243 = scalar_lea.vmem %s0, %s242
      %s244 = smul.u32 2, %s19
      %s245 = smul.u32 8, %s19
      %p246 = scmp.lt.s32.totalorder %s245, 15
      %s247 = scalar_select %p246, %s245, 15
      %s248 = smul.addr %s247, 8
      %s249 = scalar_lea.vmem %s1, %s248
      %s250 = smul.u32 8, %s19
      %p251 = scmp.lt.s32.totalorder %s20, 0
      %s252 = scalar_select %p251, %s20, 0
      %s253 = scalar_lea.vmem %s2, %s252
      %s254 = smul.u32 8, %s19
      %p255 = scmp.lt.s32.totalorder %s254, 15
      %s256 = scalar_select %p255, %s254, 15
      %s257 = smul.addr %s256, 8
      %s258 = scalar_lea.vmem %s4, %s257
      %s259 = smul.u32 8, %s19
      %p263 = scmp.eq.s32.totalorder %s20, 0
      // Predicated region
      $region37: #{gat_forward.3} parent=35 // pred_check
        %p264 = pneg %p263
      $region38: #{gat_forward.3} parent=35 // pred_check_branch
        %266 = sbr.rel (%p264) target = $region40
      $region39: #{gat_forward.3} parent=35 // pred_region
        %vm267 = vcmask 7168
        %268 = vst.msk [vmem:[#allocation2] sm:$0xff] %vm267, -inf
        %269 = vst.msk [vmem:[#allocation2 + $0x8] sm:$0xff] %vm267, -inf
        %270 = vst.msk [vmem:[#allocation2 + $0x10] sm:$0xff] %vm267, -inf
        %271 = vst.msk [vmem:[#allocation2 + $0x18] sm:$0xff] %vm267, -inf
        %272 = vst.msk [vmem:[#allocation2 + $0x20] sm:$0xff] %vm267, -inf
        %273 = vst.msk [vmem:[#allocation2 + $0x28] sm:$0xff] %vm267, -inf
        %274 = vst.msk [vmem:[#allocation2 + $0x30] sm:$0xff] %vm267, -inf
        %275 = vst.msk [vmem:[#allocation2 + $0x38] sm:$0xff] %vm267, -inf
        %276 = vst.msk [vmem:[#allocation3] sm:$0xff] %vm267, 0.0
        %277 = vst.msk [vmem:[#allocation3 + $0x8] sm:$0xff] %vm267, 0.0
        %278 = vst.msk [vmem:[#allocation3 + $0x10] sm:$0xff] %vm267, 0.0
        %279 = vst.msk [vmem:[#allocation3 + $0x18] sm:$0xff] %vm267, 0.0
        %280 = vst.msk [vmem:[#allocation3 + $0x20] sm:$0xff] %vm267, 0.0
        %281 = vst.msk [vmem:[#allocation3 + $0x28] sm:$0xff] %vm267, 0.0
        %282 = vst.msk [vmem:[#allocation3 + $0x30] sm:$0xff] %vm267, 0.0
        %283 = vst.msk [vmem:[#allocation3 + $0x38] sm:$0xff] %vm267, 0.0
        %284 = vst [vmem:[#allocation4] sm:$0xff] 0.0
        %285 = vst [vmem:[#allocation4 + $0x8] sm:$0xff] 0.0
        %286 = vst [vmem:[#allocation4 + $0x10] sm:$0xff] 0.0
        %287 = vst [vmem:[#allocation4 + $0x18] sm:$0xff] 0.0
        %288 = vst [vmem:[#allocation4 + $0x20] sm:$0xff] 0.0
        %289 = vst [vmem:[#allocation4 + $0x28] sm:$0xff] 0.0
        %290 = vst [vmem:[#allocation4 + $0x30] sm:$0xff] 0.0
        %291 = vst [vmem:[#allocation4 + $0x38] sm:$0xff] 0.0
      $region40: #{gat_forward.3} parent=35 // pred_fallthru
        _
      %v292 = vld [vmem:[%s249] sm:$0xff]
      %v293 = vld [vmem:[%s249 + $0x8] sm:$0xff]
      %v294 = vld [vmem:[%s249 + $0x10] sm:$0xff]
      %v295 = vld [vmem:[%s249 + $0x18] sm:$0xff]
      %v296 = vld [vmem:[%s249 + $0x20] sm:$0xff]
      %v297 = vld [vmem:[%s249 + $0x28] sm:$0xff]
      %v298 = vld [vmem:[%s249 + $0x30] sm:$0xff]
      %v299 = vld [vmem:[%s249 + $0x38] sm:$0xff]
      %v300 = vld [vmem:[%s253] sm:$0x1]
      %302 = vset.pattern.permute.xlu0 0
      %303 = vperm.xlu0 %302, %v292
      %v304 = vpop.permute.xlu0 %303
      %307 = vset.pattern.permute.xlu0 0
      %308 = vperm.xlu0 %307, %v293
      %v309 = vpop.permute.xlu0 %308
      %312 = vset.pattern.permute.xlu0 0
      %313 = vperm.xlu0 %312, %v294
      %v314 = vpop.permute.xlu0 %313
      %317 = vset.pattern.permute.xlu0 0
      %318 = vperm.xlu0 %317, %v295
      %v319 = vpop.permute.xlu0 %318
      %322 = vset.pattern.permute.xlu0 0
      %323 = vperm.xlu0 %322, %v296
      %v324 = vpop.permute.xlu0 %323
      %327 = vset.pattern.permute.xlu0 0
      %328 = vperm.xlu0 %327, %v297
      %v329 = vpop.permute.xlu0 %328
      %332 = vset.pattern.permute.xlu0 0
      %333 = vperm.xlu0 %332, %v298
      %v334 = vpop.permute.xlu0 %333
      %337 = vset.pattern.permute.xlu0 0
      %338 = vperm.xlu0 %337, %v299
      %v339 = vpop.permute.xlu0 %338
      %v342 = vlaneseq
      %v343 = vshrl.u32 %v342, 7
      %v344 = vsub.s32 0, %v343
      %v345 = vrot.slane %v300, %v344
      %v347 = vadd.f32 %v304, %v345
      %v348 = vadd.f32 %v309, %v345
      %v349 = vadd.f32 %v314, %v345
      %v350 = vadd.f32 %v319, %v345
      %v351 = vadd.f32 %v324, %v345
      %v352 = vadd.f32 %v329, %v345
      %v353 = vadd.f32 %v334, %v345
      %v354 = vadd.f32 %v339, %v345
      %v355 = vld [vmem:[%s243] sm:$0xff]
      %v356 = vld [vmem:[%s243 + $0x8] sm:$0xff]
      %vm357 = vnez %v355
      %vm358 = vnez %v356
      %v359 = vmul.f32 %v347, 0.01
      %v360 = vmul.f32 %v348, 0.01
      %v361 = vmul.f32 %v349, 0.01
      %v362 = vmul.f32 %v350, 0.01
      %v363 = vmul.f32 %v351, 0.01
      %v364 = vmul.f32 %v352, 0.01
      %v365 = vmul.f32 %v353, 0.01
      %v366 = vmul.f32 %v354, 0.01
      %v367 = vmax.f32 %v347, %v359
      %v368 = vmax.f32 %v348, %v360
      %v369 = vmax.f32 %v349, %v361
      %v370 = vmax.f32 %v350, %v362
      %v371 = vmax.f32 %v351, %v363
      %v372 = vmax.f32 %v352, %v364
      %v373 = vmax.f32 %v353, %v365
      %v374 = vmax.f32 %v354, %v366
      %v375 = vsel %vm357, 16843009, 0
      %v376 = vsel %vm358, 16843009, 0
      %v377 = vunpack.c.0.s8 %v375
      %v378 = vunpack.c.1.s8 %v375
      %v379 = vunpack.c.2.s8 %v375
      %v380 = vunpack.c.3.s8 %v375
      %v381 = vunpack.c.0.s8 %v376
      %v382 = vunpack.c.1.s8 %v376
      %v383 = vunpack.c.2.s8 %v376
      %v384 = vunpack.c.3.s8 %v376
      %v385 = vpack.c.b16 %v377, %v377
      %v386 = vpack.c.b8 %v385, %v385
      %v387 = vpack.c.b16 %v378, %v378
      %v388 = vpack.c.b8 %v387, %v387
      %v389 = vpack.c.b16 %v379, %v379
      %v390 = vpack.c.b8 %v389, %v389
      %v391 = vpack.c.b16 %v380, %v380
      %v392 = vpack.c.b8 %v391, %v391
      %v393 = vpack.c.b16 %v381, %v381
      %v394 = vpack.c.b8 %v393, %v393
      %v395 = vpack.c.b16 %v382, %v382
      %v396 = vpack.c.b8 %v395, %v395
      %v397 = vpack.c.b16 %v383, %v383
      %v398 = vpack.c.b8 %v397, %v397
      %v399 = vpack.c.b16 %v384, %v384
      %v400 = vpack.c.b8 %v399, %v399
      %vm401 = vnez %v386
      %vm402 = vnez %v388
      %vm403 = vnez %v390
      %vm404 = vnez %v392
      %vm405 = vnez %v394
      %vm406 = vnez %v396
      %vm407 = vnez %v398
      %vm408 = vnez %v400
      %v409 = vsel %vm401, 16843009, 0
      %v410 = vsel %vm402, 16843009, 0
      %v411 = vsel %vm403, 16843009, 0
      %v412 = vsel %vm404, 16843009, 0
      %v413 = vsel %vm405, 16843009, 0
      %v414 = vsel %vm406, 16843009, 0
      %v415 = vsel %vm407, 16843009, 0
      %v416 = vsel %vm408, 16843009, 0
      %v417 = vunpack.c.0.s8 %v409
      %v418 = vunpack.c.0.s8 %v410
      %v419 = vunpack.c.0.s8 %v411
      %v420 = vunpack.c.0.s8 %v412
      %v421 = vunpack.c.0.s8 %v413
      %v422 = vunpack.c.0.s8 %v414
      %v423 = vunpack.c.0.s8 %v415
      %v424 = vunpack.c.0.s8 %v416
      %vm425 = vcmp.ne.s32.totalorder %v417, 0
      %vm426 = vcmp.ne.s32.totalorder %v418, 0
      %vm427 = vcmp.ne.s32.totalorder %v419, 0
      %vm428 = vcmp.ne.s32.totalorder %v420, 0
      %vm429 = vcmp.ne.s32.totalorder %v421, 0
      %vm430 = vcmp.ne.s32.totalorder %v422, 0
      %vm431 = vcmp.ne.s32.totalorder %v423, 0
      %vm432 = vcmp.ne.s32.totalorder %v424, 0
      %v433 = vsel %vm425, -9e+15, %v367
      %v434 = vsel %vm426, -9e+15, %v368
      %v435 = vsel %vm427, -9e+15, %v369
      %v436 = vsel %vm428, -9e+15, %v370
      %v437 = vsel %vm429, -9e+15, %v371
      %v438 = vsel %vm430, -9e+15, %v372
      %v439 = vsel %vm431, -9e+15, %v373
      %v440 = vsel %vm432, -9e+15, %v374
      %s441 = smul.u32 %s20, 128
      %s442 = sshra.s32 %s441, 3
      %s443 = sand.u32 %s441, 7
      %s444 = smul.addr %s442, 4
      %s445 = scalar_lea.vmem %s3, %s444
      %v446 = vld [vmem:[%s445] sm:$0xf]
      %v447 = vld [vmem:[%s445 + $0x4] sm:$0xf]
      %v448 = vld [vmem:[%s445 + $0x8] sm:$0xf]
      %v449 = vld [vmem:[%s445 + $0xc] sm:$0xf]
      %v450 = vld [vmem:[%s445 + $0x10] sm:$0xf]
      %v451 = vld [vmem:[%s445 + $0x14] sm:$0xf]
      %v452 = vld [vmem:[%s445 + $0x18] sm:$0xf]
      %v453 = vld [vmem:[%s445 + $0x1c] sm:$0xf]
      %v454 = vld [vmem:[%s445 + $0x20] sm:$0xf]
      %v455 = vld [vmem:[%s445 + $0x24] sm:$0xf]
      %v456 = vld [vmem:[%s445 + $0x28] sm:$0xf]
      %v457 = vld [vmem:[%s445 + $0x2c] sm:$0xf]
      %v458 = vld [vmem:[%s445 + $0x30] sm:$0xf]
      %v459 = vld [vmem:[%s445 + $0x34] sm:$0xf]
      %v460 = vld [vmem:[%s445 + $0x38] sm:$0xf]
      %v461 = vld [vmem:[%s445 + $0x3c] sm:$0xf]
      %v462 = vld [vmem:[#allocation2] sm:$0xff]
      %v463 = vld [vmem:[#allocation2 + $0x8] sm:$0xff]
      %v464 = vld [vmem:[#allocation2 + $0x10] sm:$0xff]
      %v465 = vld [vmem:[#allocation2 + $0x18] sm:$0xff]
      %v466 = vld [vmem:[#allocation2 + $0x20] sm:$0xff]
      %v467 = vld [vmem:[#allocation2 + $0x28] sm:$0xff]
      %v468 = vld [vmem:[#allocation2 + $0x30] sm:$0xff]
      %v469 = vld [vmem:[#allocation2 + $0x38] sm:$0xff]
      %470 = vmax.xlane.f32.xlu0 %v433
      %v471 = vpop.xlane.xlu0 %470
      %472 = vmax.xlane.f32.xlu0 %v434
      %v473 = vpop.xlane.xlu0 %472
      %474 = vmax.xlane.f32.xlu0 %v435
      %v475 = vpop.xlane.xlu0 %474
      %476 = vmax.xlane.f32.xlu0 %v436
      %v477 = vpop.xlane.xlu0 %476
      %478 = vmax.xlane.f32.xlu0 %v437
      %v479 = vpop.xlane.xlu0 %478
      %480 = vmax.xlane.f32.xlu0 %v438
      %v481 = vpop.xlane.xlu0 %480
      %482 = vmax.xlane.f32.xlu0 %v439
      %v483 = vpop.xlane.xlu0 %482
      %484 = vmax.xlane.f32.xlu0 %v440
      %v485 = vpop.xlane.xlu0 %484
      %v486 = vmax.f32 %v462, %v471
      %v487 = vmax.f32 %v463, %v473
      %v488 = vmax.f32 %v464, %v475
      %v489 = vmax.f32 %v465, %v477
      %v490 = vmax.f32 %v466, %v479
      %v491 = vmax.f32 %v467, %v481
      %v492 = vmax.f32 %v468, %v483
      %v493 = vmax.f32 %v469, %v485
      %v494 = vsub.f32 %v462, %v486
      %v495 = vsub.f32 %v463, %v487
      %v496 = vsub.f32 %v464, %v488
      %v497 = vsub.f32 %v465, %v489
      %v498 = vsub.f32 %v466, %v490
      %v499 = vsub.f32 %v467, %v491
      %v500 = vsub.f32 %v468, %v492
      %v501 = vsub.f32 %v469, %v493
      %v502 = vmul.f32 %v494, 1.442695
      %v503 = vpow.pop %v502
      %v504 = vmul.f32 %v495, 1.442695
      %v505 = vpow.pop %v504
      %v506 = vmul.f32 %v496, 1.442695
      %v507 = vpow.pop %v506
      %v508 = vmul.f32 %v497, 1.442695
      %v509 = vpow.pop %v508
      %v510 = vmul.f32 %v498, 1.442695
      %v511 = vpow.pop %v510
      %v512 = vmul.f32 %v499, 1.442695
      %v513 = vpow.pop %v512
      %v514 = vmul.f32 %v500, 1.442695
      %v515 = vpow.pop %v514
      %v516 = vmul.f32 %v501, 1.442695
      %v517 = vpow.pop %v516
      %519 = vset.pattern.permute.xlu0 0
      %520 = vperm.xlu0 %519, %v486
      %v521 = vpop.permute.xlu0 %520
      %524 = vset.pattern.permute.xlu0 0
      %525 = vperm.xlu0 %524, %v487
      %v526 = vpop.permute.xlu0 %525
      %529 = vset.pattern.permute.xlu0 0
      %530 = vperm.xlu0 %529, %v488
      %v531 = vpop.permute.xlu0 %530
      %534 = vset.pattern.permute.xlu0 0
      %535 = vperm.xlu0 %534, %v489
      %v536 = vpop.permute.xlu0 %535
      %539 = vset.pattern.permute.xlu0 0
      %540 = vperm.xlu0 %539, %v490
      %v541 = vpop.permute.xlu0 %540
      %544 = vset.pattern.permute.xlu0 0
      %545 = vperm.xlu0 %544, %v491
      %v546 = vpop.permute.xlu0 %545
      %549 = vset.pattern.permute.xlu0 0
      %550 = vperm.xlu0 %549, %v492
      %v551 = vpop.permute.xlu0 %550
      %554 = vset.pattern.permute.xlu0 0
      %555 = vperm.xlu0 %554, %v493
      %v556 = vpop.permute.xlu0 %555
      %v558 = vsub.f32 %v433, %v521
      %v559 = vsub.f32 %v434, %v526
      %v560 = vsub.f32 %v435, %v531
      %v561 = vsub.f32 %v436, %v536
      %v562 = vsub.f32 %v437, %v541
      %v563 = vsub.f32 %v438, %v546
      %v564 = vsub.f32 %v439, %v551
      %v565 = vsub.f32 %v440, %v556
      %v566 = vmul.f32 %v558, 1.442695
      %v567 = vpow.pop %v566
      %v568 = vmul.f32 %v559, 1.442695
      %v569 = vpow.pop %v568
      %v570 = vmul.f32 %v560, 1.442695
      %v571 = vpow.pop %v570
      %v572 = vmul.f32 %v561, 1.442695
      %v573 = vpow.pop %v572
      %v574 = vmul.f32 %v562, 1.442695
      %v575 = vpow.pop %v574
      %v576 = vmul.f32 %v563, 1.442695
      %v577 = vpow.pop %v576
      %v578 = vmul.f32 %v564, 1.442695
      %v579 = vpow.pop %v578
      %v580 = vmul.f32 %v565, 1.442695
      %v581 = vpow.pop %v580
      %v582 = vld [vmem:[#allocation3] sm:$0xff]
      %v583 = vld [vmem:[#allocation3 + $0x8] sm:$0xff]
      %v584 = vld [vmem:[#allocation3 + $0x10] sm:$0xff]
      %v585 = vld [vmem:[#allocation3 + $0x18] sm:$0xff]
      %v586 = vld [vmem:[#allocation3 + $0x20] sm:$0xff]
      %v587 = vld [vmem:[#allocation3 + $0x28] sm:$0xff]
      %v588 = vld [vmem:[#allocation3 + $0x30] sm:$0xff]
      %v589 = vld [vmem:[#allocation3 + $0x38] sm:$0xff]
      %v590 = vmul.f32 %v503, %v582
      %v591 = vmul.f32 %v505, %v583
      %v592 = vmul.f32 %v507, %v584
      %v593 = vmul.f32 %v509, %v585
      %v594 = vmul.f32 %v511, %v586
      %v595 = vmul.f32 %v513, %v587
      %v596 = vmul.f32 %v515, %v588
      %v597 = vmul.f32 %v517, %v589
      %598 = vadd.xlane.f32.xlu0 %v567
      %v599 = vpop.xlane.xlu0 %598
      %600 = vadd.xlane.f32.xlu0 %v569
      %v601 = vpop.xlane.xlu0 %600
      %602 = vadd.xlane.f32.xlu0 %v571
      %v603 = vpop.xlane.xlu0 %602
      %604 = vadd.xlane.f32.xlu0 %v573
      %v605 = vpop.xlane.xlu0 %604
      %606 = vadd.xlane.f32.xlu0 %v575
      %v607 = vpop.xlane.xlu0 %606
      %608 = vadd.xlane.f32.xlu0 %v577
      %v609 = vpop.xlane.xlu0 %608
      %610 = vadd.xlane.f32.xlu0 %v579
      %v611 = vpop.xlane.xlu0 %610
      %612 = vadd.xlane.f32.xlu0 %v581
      %v613 = vpop.xlane.xlu0 %612
      %v614 = vadd.f32 %v590, %v599
      %v615 = vadd.f32 %v591, %v601
      %v616 = vadd.f32 %v592, %v603
      %v617 = vadd.f32 %v593, %v605
      %v618 = vadd.f32 %v594, %v607
      %v619 = vadd.f32 %v595, %v609
      %v620 = vadd.f32 %v596, %v611
      %v621 = vadd.f32 %v597, %v613
      %vm622 = vcmask 7168
      %623 = vst.msk [vmem:[#allocation3] sm:$0xff] %vm622, %v614
      %624 = vst.msk [vmem:[#allocation3 + $0x8] sm:$0xff] %vm622, %v615
      %625 = vst.msk [vmem:[#allocation3 + $0x10] sm:$0xff] %vm622, %v616
      %626 = vst.msk [vmem:[#allocation3 + $0x18] sm:$0xff] %vm622, %v617
      %627 = vst.msk [vmem:[#allocation3 + $0x20] sm:$0xff] %vm622, %v618
      %628 = vst.msk [vmem:[#allocation3 + $0x28] sm:$0xff] %vm622, %v619
      %629 = vst.msk [vmem:[#allocation3 + $0x30] sm:$0xff] %vm622, %v620
      %630 = vst.msk [vmem:[#allocation3 + $0x38] sm:$0xff] %vm622, %v621
      %v631 = vld [vmem:[#allocation4] sm:$0xff]
      %v632 = vld [vmem:[#allocation4 + $0x8] sm:$0xff]
      %v633 = vld [vmem:[#allocation4 + $0x10] sm:$0xff]
      %v634 = vld [vmem:[#allocation4 + $0x18] sm:$0xff]
      %v635 = vld [vmem:[#allocation4 + $0x20] sm:$0xff]
      %v636 = vld [vmem:[#allocation4 + $0x28] sm:$0xff]
      %v637 = vld [vmem:[#allocation4 + $0x30] sm:$0xff]
      %v638 = vld [vmem:[#allocation4 + $0x38] sm:$0xff]
      %640 = vset.pattern.permute.xlu0 0
      %641 = vperm.xlu0 %640, %v503
      %v642 = vpop.permute.xlu0 %641
      %645 = vset.pattern.permute.xlu0 0
      %646 = vperm.xlu0 %645, %v505
      %v647 = vpop.permute.xlu0 %646
      %650 = vset.pattern.permute.xlu0 0
      %651 = vperm.xlu0 %650, %v507
      %v652 = vpop.permute.xlu0 %651
      %655 = vset.pattern.permute.xlu0 0
      %656 = vperm.xlu0 %655, %v509
      %v657 = vpop.permute.xlu0 %656
      %660 = vset.pattern.permute.xlu0 0
      %661 = vperm.xlu0 %660, %v511
      %v662 = vpop.permute.xlu0 %661
      %665 = vset.pattern.permute.xlu0 0
      %666 = vperm.xlu0 %665, %v513
      %v667 = vpop.permute.xlu0 %666
      %670 = vset.pattern.permute.xlu0 0
      %671 = vperm.xlu0 %670, %v515
      %v672 = vpop.permute.xlu0 %671
      %675 = vset.pattern.permute.xlu0 0
      %676 = vperm.xlu0 %675, %v517
      %v677 = vpop.permute.xlu0 %676
      %v679 = vmul.f32 %v642, %v631
      %v680 = vmul.f32 %v647, %v632
      %v681 = vmul.f32 %v652, %v633
      %v682 = vmul.f32 %v657, %v634
      %v683 = vmul.f32 %v662, %v635
      %v684 = vmul.f32 %v667, %v636
      %v685 = vmul.f32 %v672, %v637
      %v686 = vmul.f32 %v677, %v638
      %v687 = vpack.c.bf16 %v569, %v567
      %v688 = vpack.c.bf16 %v573, %v571
      %v689 = vpack.c.bf16 %v577, %v575
      %v690 = vpack.c.bf16 %v581, %v579
      %v707 = vunpack.c.l.b16 %v446
      %v708 = vunpack.c.l.b16 %v447
      %v709 = vunpack.c.l.b16 %v448
      %v710 = vunpack.c.l.b16 %v449
      %v711 = vunpack.c.l.b16 %v450
      %v712 = vunpack.c.l.b16 %v451
      %v713 = vunpack.c.l.b16 %v452
      %v714 = vunpack.c.l.b16 %v453
      %v715 = vunpack.c.l.b16 %v454
      %v716 = vunpack.c.l.b16 %v455
      %v717 = vunpack.c.l.b16 %v456
      %v718 = vunpack.c.l.b16 %v457
      %v719 = vunpack.c.l.b16 %v458
      %v720 = vunpack.c.l.b16 %v459
      %v721 = vunpack.c.l.b16 %v460
      %v722 = vunpack.c.l.b16 %v461
      %v723 = vpack.c.b16 %v708, %v707
      %v724 = vpack.c.b16 %v710, %v709
      %v725 = vpack.c.b16 %v712, %v711
      %v726 = vpack.c.b16 %v714, %v713
      %v727 = vpack.c.b16 %v716, %v715
      %v728 = vpack.c.b16 %v718, %v717
      %v729 = vpack.c.b16 %v720, %v719
      %v730 = vpack.c.b16 %v722, %v721
      %739 = vmatprep.subr.bf16.mxu0 0
      %740 = vmatpush1.bf16.msra.mxu0 %v723
      %741 = vmatprep.subr.bf16.mxu0 0
      %742 = vmatpush1.bf16.msra.mxu0 %v724
      %743 = vmatprep.subr.bf16.mxu0 0
      %744 = vmatpush1.bf16.msra.mxu0 %v725
      %745 = vmatprep.subr.bf16.mxu0 0
      %746 = vmatpush1.bf16.msra.mxu0 %v726
      %747 = vmatprep.subr.bf16.mxu0 0
      %748 = vmatpush1.bf16.msra.mxu0 %v727
      %749 = vmatprep.subr.bf16.mxu0 0
      %750 = vmatpush1.bf16.msra.mxu0 %v728
      %751 = vmatprep.subr.bf16.mxu0 0
      %752 = vmatpush1.bf16.msra.mxu0 %v729
      %753 = vmatprep.subr.bf16.mxu0 0
      %754 = vmatpush1.bf16.msra.mxu0 %v730
      %755 = vmatprep.subr.bf16.mxu0 0
      %756 = vmatpush1.bf16.msra.mxu0 0
      %757 = vmatprep.subr.bf16.mxu0 0
      %758 = vmatpush1.bf16.msra.mxu0 0
      %759 = vmatprep.subr.bf16.mxu0 0
      %760 = vmatpush1.bf16.msra.mxu0 0
      %761 = vmatprep.subr.bf16.mxu0 0
      %762 = vmatpush1.bf16.msra.mxu0 0
      %763 = vmatprep.subr.bf16.mxu0 0
      %764 = vmatpush1.bf16.msra.mxu0 0
      %765 = vmatprep.subr.bf16.mxu0 0
      %766 = vmatpush1.bf16.msra.mxu0 0
      %767 = vmatprep.subr.bf16.mxu0 0
      %768 = vmatpush1.bf16.msra.mxu0 0
      %769 = vmatprep.subr.bf16.mxu0 0
      %770 = vmatpush1.bf16.msra.mxu0 0
      %771 = vmatprep.mubr.bf16.mxu0 0
      %772 = vmatmul.mubr.bf16.gmra.mrb[0].mxu0 %v687
      %v773 = vpop.f32.mrb[0].mxu0
      %v774 = vadd.f32 0.0, %v773
      %v775 = vpop.f32.mrb[0].mxu0
      %v776 = vpop.f32.mrb[0].mxu0
      %v777 = vadd.f32 0.0, %v776
      %v778 = vpop.f32.mrb[0].mxu0
      %779 = vmatprep.mubr.bf16.mxu0 0
      %780 = vmatmul.mubr.bf16.gmra.mrb[0].mxu0 %v688
      %v781 = vpop.f32.mrb[0].mxu0
      %v782 = vadd.f32 0.0, %v781
      %v783 = vpop.f32.mrb[0].mxu0
      %v784 = vpop.f32.mrb[0].mxu0
      %v785 = vadd.f32 0.0, %v784
      %v786 = vpop.f32.mrb[0].mxu0
      %787 = vmatprep.mubr.bf16.mxu0 0
      %788 = vmatmul.mubr.bf16.gmra.mrb[0].mxu0 %v689
      %v789 = vpop.f32.mrb[0].mxu0
      %v790 = vadd.f32 0.0, %v789
      %v791 = vpop.f32.mrb[0].mxu0
      %v792 = vpop.f32.mrb[0].mxu0
      %v793 = vadd.f32 0.0, %v792
      %v794 = vpop.f32.mrb[0].mxu0
      %795 = vmatprep.mubr.bf16.mxu0 0
      %796 = vmatmul.mubr.bf16.gmra.mrb[0].mxu0 %v690
      %v797 = vpop.f32.mrb[0].mxu0
      %v798 = vadd.f32 0.0, %v797
      %v799 = vpop.f32.mrb[0].mxu0
      %v800 = vpop.f32.mrb[0].mxu0
      %v801 = vadd.f32 0.0, %v800
      %v802 = vpop.f32.mrb[0].mxu0
      %803 = vdwg.mxu0
      %v804 = vadd.f32 %v679, %v774
      %v805 = vadd.f32 %v680, %v777
      %v806 = vadd.f32 %v681, %v782
      %v807 = vadd.f32 %v682, %v785
      %v808 = vadd.f32 %v683, %v790
      %v809 = vadd.f32 %v684, %v793
      %v810 = vadd.f32 %v685, %v798
      %v811 = vadd.f32 %v686, %v801
      %812 = vst [vmem:[#allocation4] sm:$0xff] %v804
      %813 = vst [vmem:[#allocation4 + $0x8] sm:$0xff] %v805
      %814 = vst [vmem:[#allocation4 + $0x10] sm:$0xff] %v806
      %815 = vst [vmem:[#allocation4 + $0x18] sm:$0xff] %v807
      %816 = vst [vmem:[#allocation4 + $0x20] sm:$0xff] %v808
      %817 = vst [vmem:[#allocation4 + $0x28] sm:$0xff] %v809
      %818 = vst [vmem:[#allocation4 + $0x30] sm:$0xff] %v810
      %819 = vst [vmem:[#allocation4 + $0x38] sm:$0xff] %v811
      %820 = vst.msk [vmem:[#allocation2] sm:$0xff] %vm622, %v486
      %821 = vst.msk [vmem:[#allocation2 + $0x8] sm:$0xff] %vm622, %v487
      %822 = vst.msk [vmem:[#allocation2 + $0x10] sm:$0xff] %vm622, %v488
      %823 = vst.msk [vmem:[#allocation2 + $0x18] sm:$0xff] %vm622, %v489
      %824 = vst.msk [vmem:[#allocation2 + $0x20] sm:$0xff] %vm622, %v490
      %825 = vst.msk [vmem:[#allocation2 + $0x28] sm:$0xff] %vm622, %v491
      %826 = vst.msk [vmem:[#allocation2 + $0x30] sm:$0xff] %vm622, %v492
      %827 = vst.msk [vmem:[#allocation2 + $0x38] sm:$0xff] %vm622, %v493
      // Predicated region
      $region41: #{gat_forward.3} parent=35 // pred_check
        %p828 = pneg %p263
      $region42: #{gat_forward.3} parent=35 // pred_check_branch
        %830 = sbr.rel (%p828) target = $region44
      $region43: #{gat_forward.3} parent=35 // pred_region
        %v831 = vld [vmem:[#allocation4] sm:$0xff]
        %v832 = vld [vmem:[#allocation4 + $0x8] sm:$0xff]
        %v833 = vld [vmem:[#allocation4 + $0x10] sm:$0xff]
        %v834 = vld [vmem:[#allocation4 + $0x18] sm:$0xff]
        %v835 = vld [vmem:[#allocation4 + $0x20] sm:$0xff]
        %v836 = vld [vmem:[#allocation4 + $0x28] sm:$0xff]
        %v837 = vld [vmem:[#allocation4 + $0x30] sm:$0xff]
        %v838 = vld [vmem:[#allocation4 + $0x38] sm:$0xff]
        %v839 = vld [vmem:[#allocation3] sm:$0xff]
        %v840 = vld [vmem:[#allocation3 + $0x8] sm:$0xff]
        %v841 = vld [vmem:[#allocation3 + $0x10] sm:$0xff]
        %v842 = vld [vmem:[#allocation3 + $0x18] sm:$0xff]
        %v843 = vld [vmem:[#allocation3 + $0x20] sm:$0xff]
        %v844 = vld [vmem:[#allocation3 + $0x28] sm:$0xff]
        %v845 = vld [vmem:[#allocation3 + $0x30] sm:$0xff]
        %v846 = vld [vmem:[#allocation3 + $0x38] sm:$0xff]
        %v847 = vrcp.pop %v839
        %v848 = vrcp.pop %v840
        %v849 = vrcp.pop %v841
        %v850 = vrcp.pop %v842
        %v851 = vrcp.pop %v843
        %v852 = vrcp.pop %v844
        %v853 = vrcp.pop %v845
        %v854 = vrcp.pop %v846
        %856 = vset.pattern.permute.xlu0 0
        %857 = vperm.xlu0 %856, %v847
        %v858 = vpop.permute.xlu0 %857
        %861 = vset.pattern.permute.xlu0 0
        %862 = vperm.xlu0 %861, %v848
        %v863 = vpop.permute.xlu0 %862
        %866 = vset.pattern.permute.xlu0 0
        %867 = vperm.xlu0 %866, %v849
        %v868 = vpop.permute.xlu0 %867
        %871 = vset.pattern.permute.xlu0 0
        %872 = vperm.xlu0 %871, %v850
        %v873 = vpop.permute.xlu0 %872
        %876 = vset.pattern.permute.xlu0 0
        %877 = vperm.xlu0 %876, %v851
        %v878 = vpop.permute.xlu0 %877
        %881 = vset.pattern.permute.xlu0 0
        %882 = vperm.xlu0 %881, %v852
        %v883 = vpop.permute.xlu0 %882
        %886 = vset.pattern.permute.xlu0 0
        %887 = vperm.xlu0 %886, %v853
        %v888 = vpop.permute.xlu0 %887
        %891 = vset.pattern.permute.xlu0 0
        %892 = vperm.xlu0 %891, %v854
        %v893 = vpop.permute.xlu0 %892
        %v895 = vmul.f32 %v831, %v858
        %v896 = vmul.f32 %v832, %v863
        %v897 = vmul.f32 %v833, %v868
        %v898 = vmul.f32 %v834, %v873
        %v899 = vmul.f32 %v835, %v878
        %v900 = vmul.f32 %v836, %v883
        %v901 = vmul.f32 %v837, %v888
        %v902 = vmul.f32 %v838, %v893
        %903 = vst [vmem:[%s258] sm:$0xff] %v895
        %904 = vst [vmem:[%s258 + $0x8] sm:$0xff] %v896
        %905 = vst [vmem:[%s258 + $0x10] sm:$0xff] %v897
        %906 = vst [vmem:[%s258 + $0x18] sm:$0xff] %v898
        %907 = vst [vmem:[%s258 + $0x20] sm:$0xff] %v899
        %908 = vst [vmem:[%s258 + $0x28] sm:$0xff] %v900
        %909 = vst [vmem:[%s258 + $0x30] sm:$0xff] %v901
        %910 = vst [vmem:[%s258 + $0x38] sm:$0xff] %v902
      $region44: #{gat_forward.3} parent=35 // pred_fallthru
        _
      %s911 = smul.u32 8, %s19
      %p912 = scmp.lt.s32.totalorder %s911, 15
      %s913 = scalar_select %p912, %s911, 15
      %s914 = smul.addr %s913, 8
      %s915 = scalar_lea.vmem %s4, %s914
      // Predicated region
      $region45: #{gat_forward.3} parent=35 // pred_check
        %p916 = pneg %p146
      $region46: #{gat_forward.3} parent=35 // pred_check_branch
        %918 = sbr.rel (%p916) target = $region48
      $region47: #{gat_forward.3} parent=35 // pred_region
        %s919 = smul.u32 8, %s19
      $region48: #{gat_forward.3} parent=35 // pred_fallthru
        _
    $region36: #{gat_forward.3} parent=5 // pred_fallthru
      _
    %p920 = scmp.le.s32.totalorder 2, %s10
    // Predicated region
    $region49: #{gat_forward.3} parent=5 // pred_check
      %p921 = pneg %p920
    $region50: #{gat_forward.3} parent=5 // pred_check_branch
      %923 = sbr.rel (%p921) target = $region52
    $region51: #{gat_forward.3} parent=5 // pred_region
      %s924 = ssub.s32 %s10, 2
      // Predicated region
      $region53: #{gat_forward.3} parent=51 // pred_check
        %p925 = pneg %p152
      $region54: #{gat_forward.3} parent=51 // pred_check_branch
        %927 = sbr.rel (%p925) target = $region56
      $region55: #{gat_forward.3} parent=51 // pred_region
        %s928 = smul.u32 8, %s21
        %p929 = scmp.lt.s32.totalorder %s928, 15
        %s930 = scalar_select %p929, %s928, 15
        %s931 = smul.addr %s930, 8
        %s932 = scalar_lea.vmem %s4, %s931
      $region56: #{gat_forward.3} parent=51 // pred_fallthru
        _
    $region52: #{gat_forward.3} parent=5 // pred_fallthru
      _
  $region6: #{gat_forward.3} parent=0 // loop_footer
    %s14 = sadd.s32 1, %s10
  $region7: #{gat_forward.3} parent=0 // loop_footer_branch
    %9 = sbr.rel target = $region3
  $region8: #{gat_forward.3} parent=0 // loop_exit
    _

</llo_original>
